<compile_context>
chip_gen: v6e
topology: v6e:2x2x1
jax: 0.10.0
libtpu: 0.0.40
codegen_flags: <defaults>
</compile_context>

<pallas_src>
import functools

import jax
import jax.numpy as jnp
from jax import lax
from jax.experimental import pallas as pl
from jax.experimental.pallas import tpu as pltpu

_SUBLANE = 8                       # f32 sublane tile; batch is padded to a multiple of this
_VMEM_BUDGET = 40 * 1024 * 1024    # budget for auto-deriving t_chunk (fits v7x 64 MiB VMEM)
_VMEM_LIMIT = 64 * 1024 * 1024     # explicit scoped-VMEM limit (v5e default is only 16 MiB)


def _lstm_chunk_kernel(max_len_ref, lens_ref, x_ref, wih_ref, whh_ref, b_ref,
                       o_ref, h_ref, c_ref, xg_ref, *,
                       hidden_size, t_chunk, batch, unroll):
    """One T-chunk of the LSTM recurrence.

    max_len_ref: (1,)            int32 SMEM (scalar prefetch)  max(lens)
    lens_ref:    (B, 1)          int32 VMEM (single-buffered)  per-sequence lengths
    x_ref:       (T_CHUNK*B, E)  bf16                          time-major embedded inputs
    wih_ref:     (E, 4H)         bf16  (single-buffered)       input->hidden weights^T
    whh_ref:     (H, 4H)         bf16  (single-buffered)       hidden->hidden weights^T
    b_ref:       (1, 4H)         f32   (single-buffered)       combined bias (b_ih + b_hh)
    o_ref:       (T_CHUNK*B, H)  f32                           outputs (zero past lens)
    h_ref/c_ref: (B, H)          f32 VMEM scratch              recurrent carry across chunks
    xg_ref:      (T_CHUNK*B, 4H) f32 VMEM scratch              precomputed input projection
    """
    H = hidden_size
    B = batch
    TC = t_chunk

    chunk = pl.program_id(0)
    chunk_start = chunk * TC

    # Zero the recurrent state only on the first chunk; it persists in VMEM scratch
    # across the sequential ("arbitrary") T-chunk grid.
    @pl.when(chunk == 0)
    def _():
        h_ref[...] = jnp.zeros_like(h_ref)
        c_ref[...] = jnp.zeros_like(c_ref)

    active = chunk_start < max_len_ref[0]

    @pl.when(jnp.logical_not(active))
    def _():
        # Entire chunk lies past max(lens): pad_packed semantics -> zeros.
        o_ref[...] = jnp.zeros_like(o_ref)

    @pl.when(active)
    def _():
        # ---- Phase 1: hoisted input projection, one bf16 MXU matmul per chunk ----
        # f32 accumulation; xg, gates and all elementwise math stay f32 (v5e-safe).
        xg_ref[...] = (
            jnp.dot(x_ref[...], wih_ref[...], preferred_element_type=jnp.float32)
            + b_ref[...]
        )

        # ---- Phase 2: serial recurrence (only h @ W_hh on the critical chain) ----
        whh = whh_ref[...]                           # (H, 4H) bf16, loop-invariant
        thresh = lens_ref[...] - chunk_start         # (B, 1) int32, hoisted

        def step(t, carry):
            h, c = carry
            row = pl.multiple_of(t * B, _SUBLANE)    # B % 8 == 0 -> aligned sublane slice
            gates = (xg_ref[pl.ds(row, B), :]
                     + jnp.dot(h.astype(jnp.bfloat16), whh,
                               preferred_element_type=jnp.float32))    # (B, 4H) f32
            # PyTorch gate order: input, forget, cell(g), output.
            i = jax.nn.sigmoid(gates[:, 0:H])
            f = jax.nn.sigmoid(gates[:, H:2 * H])
            g = jnp.tanh(gates[:, 2 * H:3 * H])
            o = jax.nn.sigmoid(gates[:, 3 * H:4 * H])
            c_new = f * c + i * g
            h_new = o * jnp.tanh(c_new)
            # pack/pad semantics: zero outputs at t >= lens[b].  (The carry keeps
            # updating with padded inputs; this never affects valid outputs and the
            # final (h_n, c_n) is not exposed by the module's forward.)
            valid = t < thresh                       # (B, 1) bool
            o_ref[pl.ds(row, B), :] = jnp.where(valid, h_new, 0.0)
            return h_new, c_new

        h_fin, c_fin = lax.fori_loop(0, TC, step, (h_ref[...], c_ref[...]),
                                     unroll=unroll)
        h_ref[...] = h_fin
        c_ref[...] = c_fin


def _derive_t_chunk(T, B, E, H, budget=_VMEM_BUDGET):
    """Largest t_chunk whose per-chunk VMEM footprint fits the budget."""
    fixed = (E * 4 * H * 2          # W_ih^T (bf16, single-buffered)
             + H * 4 * H * 2        # W_hh^T (bf16, single-buffered)
             + 4 * H * 4            # bias (f32)
             + B * 4                # lens
             + 2 * B * H * 4)       # h/c carries (f32)
    per_t = B * (2 * E * 2          # x chunk (bf16, double-buffered)
                 + 2 * H * 4        # out chunk (f32, double-buffered)
                 + 4 * H * 4)       # xg scratch (f32)
    tc = (budget - fixed) // max(per_t, 1)
    return int(max(1, min(T, tc, 512)))


@functools.partial(jax.jit,
                   static_argnames=("hidden_size", "t_chunk", "batch",
                                    "single_buffer_invariants"))
def _lstm_pallas(max_len, lens2d, x2d, wih_t, whh_t, b2d, *,
                 hidden_size, t_chunk, batch, single_buffer_invariants):
    TB, E = x2d.shape
    B = batch
    H = hidden_size
    n_chunks = (TB // B) // t_chunk

    # Size the unroll against the live set (~10*B*H f32 per unrolled iter) vs the
    # 64 x 4 KiB vreg file; keeps unroll ~8 at small sizes, shrinks it at production B*H.
    unroll = int(max(1, min(t_chunk, 8, 65536 // max(1, 10 * B * H))))

    kernel = functools.partial(_lstm_chunk_kernel, hidden_size=H,
                               t_chunk=t_chunk, batch=B, unroll=unroll)

    if single_buffer_invariants:
        # Loop-invariant blocks: one VMEM buffer is enough (default double-buffering
        # would waste a full extra copy of the weights).
        def inv_spec(shape, imap):
            return pl.BlockSpec(shape, imap, pipeline_mode=pl.Buffered(1))
    else:
        inv_spec = pl.BlockSpec

    return pl.pallas_call(
        kernel,
        out_shape=jax.ShapeDtypeStruct((TB, H), jnp.float32),
        grid_spec=pltpu.PrefetchScalarGridSpec(
            num_scalar_prefetch=1,                                    # max_len -> SMEM
            grid=(n_chunks,),
            in_specs=[
                inv_spec((B, 1), lambda t, ml: (0, 0)),               # lens (int32)
                pl.BlockSpec((t_chunk * B, E), lambda t, ml: (t, 0)), # x chunk (bf16)
                inv_spec((E, 4 * H), lambda t, ml: (0, 0)),           # W_ih^T (bf16)
                inv_spec((H, 4 * H), lambda t, ml: (0, 0)),           # W_hh^T (bf16)
                inv_spec((1, 4 * H), lambda t, ml: (0, 0)),           # bias (f32)
            ],
            out_specs=pl.BlockSpec((t_chunk * B, H), lambda t, ml: (t, 0)),
            scratch_shapes=[
                pltpu.VMEM((B, H), jnp.float32),                      # h carry
                pltpu.VMEM((B, H), jnp.float32),                      # c carry
                pltpu.VMEM((t_chunk * B, 4 * H), jnp.float32),        # Xg per chunk
            ],
        ),
        compiler_params=pltpu.CompilerParams(
            dimension_semantics=("arbitrary",),                       # serial recurrence over T
            vmem_limit_bytes=_VMEM_LIMIT,
        ),
    )(max_len, lens2d, x2d, wih_t, whh_t, b2d)


class RNNLanguageModelPallas:
    """JAX/Pallas port of the PyTorch RNNLanguageModel forward pass."""

    def __init__(self, n_tokens, is_forward_lm, hidden_size, embedding_size=100,
                 t_chunk=None, key=None):
        self.is_forward_lm = is_forward_lm
        self.n_tokens = n_tokens
        self.hidden_size = hidden_size
        self.embedding_size = embedding_size
        self.t_chunk = t_chunk   # None -> auto-derived from the VMEM budget

        if key is None:
            key = jax.random.PRNGKey(0)
        k_emb, k_wih, k_whh, k_bih, k_bhh = jax.random.split(key, 5)

        H, E = hidden_size, embedding_size
        scale = 1.0 / jnp.sqrt(jnp.float32(H))
        # Master f32 parameters (as in the PyTorch module).
        self.encoder_weight = jax.random.normal(k_emb, (n_tokens, E), jnp.float32)
        self.w_ih = jax.random.uniform(k_wih, (4 * H, E), jnp.float32, -scale, scale)
        self.w_hh = jax.random.uniform(k_whh, (4 * H, H), jnp.float32, -scale, scale)
        self.b_ih = jax.random.uniform(k_bih, (4 * H,), jnp.float32, -scale, scale)
        self.b_hh = jax.random.uniform(k_bhh, (4 * H,), jnp.float32, -scale, scale)

        # Kernel-friendly layouts, precomputed once.  Streamed/matmul operands in bf16
        # (MXU-native, half the DMA bytes); bias stays f32.
        self.encoder_weight_bf16 = self.encoder_weight.astype(jnp.bfloat16)
        self.w_ih_t_bf16 = jnp.transpose(self.w_ih).astype(jnp.bfloat16)   # (E, 4H)
        self.w_hh_t_bf16 = jnp.transpose(self.w_hh).astype(jnp.bfloat16)   # (H, 4H)
        self.b2d = (self.b_ih + self.b_hh).reshape(1, 4 * H)               # (1, 4H) f32

    def __call__(self, ids, lens):
        """ids: (B, T) int32, lens: (B,) int32 -> (B, T, H) float32.

        Positions t >= lens[b] are zero (pad_packed_sequence semantics).  The full T
        length is returned (no host sync on max(lens)); slice to max(lens) on the
        caller side if the truncated shape is needed.
        """
        B, T = ids.shape
        H, E = self.hidden_size, self.embedding_size

        # Pad batch to a multiple of the 8-row sublane tile so all per-step sublane
        # slices/stores inside the kernel are tile-aligned.
        B_pad = ((B + _SUBLANE - 1) // _SUBLANE) * _SUBLANE

        tc = self.t_chunk if self.t_chunk is not None else _derive_t_chunk(T, B_pad, E, H)
        tc = max(1, min(int(tc), T))
        n_chunks = -(-T // tc)
        T_pad = n_chunks * tc

        ids_p = ids.astype(jnp.int32)
        lens_p = lens.astype(jnp.int32)
        if B_pad > B:
            ids_p = jnp.pad(ids_p, ((0, B_pad - B), (0, 0)))
            lens_p = jnp.pad(lens_p, (0, B_pad - B))      # padded rows: lens=0 -> all-zero output

        # Embedding lookup producing time-major, flattened (T*B_pad, E) bf16 directly:
        # the transpose is done on the tiny int id matrix, not the activations.
        ids_tb = jnp.transpose(ids_p).reshape(T * B_pad)
        x2d = jnp.take(self.encoder_weight_bf16, ids_tb, axis=0)   # (T*B_pad, E) bf16
        if T_pad > T:
            x2d = jnp.pad(x2d, ((0, (T_pad - T) * B_pad), (0, 0)))

        lens2d = lens_p.reshape(B_pad, 1)
        max_len = jnp.max(lens_p).astype(jnp.int32).reshape(1)     # stays on device (SMEM prefetch)

        args = (max_len, lens2d, x2d, self.w_ih_t_bf16, self.w_hh_t_bf16, self.b2d)
        kw = dict(hidden_size=H, t_chunk=tc, batch=B_pad)
        try:
            out2d = _lstm_pallas(*args, single_buffer_invariants=True, **kw)
        except Exception:
            # JAX versions without BlockSpec(pipeline_mode=pl.Buffered(1)) support:
            # fall back to default double-buffering of the loop-invariant blocks.
            out2d = _lstm_pallas(*args, single_buffer_invariants=False, **kw)

        out = out2d.reshape(T_pad, B_pad, H)[:T, :B]               # (T, B, H)
        # TODO(synk): production (H % 128 == 0): write batch-first blocks from the
        # kernel to eliminate this (T,B,H)->(B,T,H) HBM round trip.
        return jnp.transpose(out, (1, 0, 2))                       # (B, T, H)

    # Pure-JAX reference (lax.scan) for verification.  It mirrors the kernel's bf16
    # operand quantization (bf16 params and bf16-rounded h fed to the matmuls; f32
    # accumulation/state), so the comparison isolates kernel bugs from expected
    # mixed-precision rounding.
    def reference(self, ids, lens):
        B, T = ids.shape
        H = self.hidden_size
        wih = self.w_ih_t_bf16.astype(jnp.float32)
        whh = self.w_hh_t_bf16.astype(jnp.float32)
        emb = jnp.take(self.encoder_weight_bf16.astype(jnp.float32), ids, axis=0)
        x_tbe = jnp.transpose(emb, (1, 0, 2))                      # (T, B, E)
        mask = (jnp.arange(T)[:, None] < lens[None, :]).astype(jnp.float32)[..., None]

        def step(carry, xm):
            h, c = carry
            x_t, m_t = xm
            hq = h.astype(jnp.bfloat16).astype(jnp.float32)
            gates = x_t @ wih + hq @ whh + self.b2d
            i = jax.nn.sigmoid(gates[:, 0:H])
            f = jax.nn.sigmoid(gates[:, H:2 * H])
            g = jnp.tanh(gates[:, 2 * H:3 * H])
            o = jax.nn.sigmoid(gates[:, 3 * H:4 * H])
            c = f * c + i * g
            h = o * jnp.tanh(c)
            return (h, c), h * m_t

        h0 = jnp.zeros((B, H), jnp.float32)
        c0 = jnp.zeros((B, H), jnp.float32)
        _, ys = lax.scan(step, (h0, c0), (x_tbe, mask))
        return jnp.transpose(ys, (1, 0, 2))                        # (B, T, H)


if __name__ == "__main__":
    key = jax.random.PRNGKey(0)
    k_model, k_ids = jax.random.split(key)

    n_tokens = 50
    hidden_size = 32
    embedding_size = 32
    B, T = 5, 12                    # B=5 exercises the batch padding to the 8-sublane tile

    model = RNNLanguageModelPallas(
        n_tokens=n_tokens,
        is_forward_lm=True,
        hidden_size=hidden_size,
        embedding_size=embedding_size,
        t_chunk=4,                  # grid of 3 T-chunks; exercises carry + chunk skip
        key=k_model,
    )

    ids = jax.random.randint(k_ids, (B, T), 0, n_tokens, dtype=jnp.int32)
    # max(lens)=7 < T=12, so the last T-chunk is skipped in-kernel (zero fill).
    lens = jnp.array([7, 5, 7, 3, 6], dtype=jnp.int32)

    out = jax.block_until_ready(model(ids, lens))
    ref = jax.block_until_ready(model.reference(ids, lens))

    assert out.shape == (B, T, hidden_size), out.shape
    err = float(jnp.max(jnp.abs(out - ref)))
    assert jnp.allclose(out, ref, atol=2e-3, rtol=2e-3), f"mismatch vs reference: {err}"

    print("KERNEL_OK")
</pallas_src>

<mosaic_0001>
module attributes {stable_mosaic.version = 11 : i64} {
  func.func @_lstm_chunk_kernel(%arg0: i32, %arg1: memref<1xi32, #tpu.memory_space<smem>>, %arg2: memref<8x1xi32, #tpu.memory_space<vmem>>, %arg3: memref<32x32xbf16, #tpu.memory_space<vmem>>, %arg4: memref<32x128xbf16, #tpu.memory_space<vmem>>, %arg5: memref<32x128xbf16, #tpu.memory_space<vmem>>, %arg6: memref<1x128xf32, #tpu.memory_space<vmem>>, %arg7: memref<32x32xf32, #tpu.memory_space<vmem>>, %arg8: memref<8x32xf32, #tpu.memory_space<vmem>>, %arg9: memref<8x32xf32, #tpu.memory_space<vmem>>, %arg10: memref<32x128xf32, #tpu.memory_space<vmem>>) attributes {dimension_semantics = [#tpu.dimension_semantics<arbitrary>], iteration_bounds = array<i64: 3>, scalar_prefetch = 1 : i64, scratch_operands = 3 : i64, tpu.core_type = #tpu.core_type<tc>, window_params = [{pipeline_mode = #tpu.pipeline_mode<synchronous>, transform_indices = @transform_0, window_bounds = array<i64: 8, 1>}, {transform_indices = @transform_1, window_bounds = array<i64: 32, 32>}, {pipeline_mode = #tpu.pipeline_mode<synchronous>, transform_indices = @transform_2, window_bounds = array<i64: 32, 128>}, {pipeline_mode = #tpu.pipeline_mode<synchronous>, transform_indices = @transform_3, window_bounds = array<i64: 32, 128>}, {pipeline_mode = #tpu.pipeline_mode<synchronous>, transform_indices = @transform_4, window_bounds = array<i64: 1, 128>}, {transform_indices = @transform_5, window_bounds = array<i64: 32, 32>}]} {
    %c4_i32 = arith.constant 4 : i32
    %0 = arith.muli %arg0, %c4_i32 : i32
    %c0_i32 = arith.constant 0 : i32
    %1 = arith.cmpi eq, %arg0, %c0_i32 : i32
    %2 = arith.extui %1 : i1 to i32
    %c0_i32_0 = arith.constant 0 : i32
    %3 = arith.cmpi ne, %2, %c0_i32_0 : i32
    scf.if %3 {
      %cst = arith.constant 0.000000e+00 : f32
      %11 = vector.broadcast %cst : f32 to vector<8x32xf32>
      %c0_3 = arith.constant 0 : index
      %c0_4 = arith.constant 0 : index
      %12 = vector.load %arg8[%c0_3, %c0_4] : memref<8x32xf32, #tpu.memory_space<vmem>>, vector<8x32xf32>
      tpu.vector_store %arg8[%c0_3, %c0_4], %11 {strides = array<i32>} : memref<8x32xf32, #tpu.memory_space<vmem>>, vector<8x32xf32>,
      %cst_5 = arith.constant 0.000000e+00 : f32
      %13 = vector.broadcast %cst_5 : f32 to vector<8x32xf32>
      %c0_6 = arith.constant 0 : index
      %c0_7 = arith.constant 0 : index
      %14 = vector.load %arg9[%c0_6, %c0_7] : memref<8x32xf32, #tpu.memory_space<vmem>>, vector<8x32xf32>
      tpu.vector_store %arg9[%c0_6, %c0_7], %13 {strides = array<i32>} : memref<8x32xf32, #tpu.memory_space<vmem>>, vector<8x32xf32>,
    } else {
    }
    %c0 = arith.constant 0 : index
    %4 = memref.load %arg1[%c0] : memref<1xi32, #tpu.memory_space<smem>>
    %5 = arith.cmpi slt, %0, %4 : i32
    %true = arith.constant true
    %6 = arith.xori %5, %true : i1
    %7 = arith.extui %6 : i1 to i32
    %c0_i32_1 = arith.constant 0 : i32
    %8 = arith.cmpi ne, %7, %c0_i32_1 : i32
    scf.if %8 {
      %cst = arith.constant 0.000000e+00 : f32
      %11 = vector.broadcast %cst : f32 to vector<32x32xf32>
      %c0_3 = arith.constant 0 : index
      %c0_4 = arith.constant 0 : index
      %12 = vector.load %arg7[%c0_3, %c0_4] : memref<32x32xf32, #tpu.memory_space<vmem>>, vector<32x32xf32>
      tpu.vector_store %arg7[%c0_3, %c0_4], %11 {strides = array<i32>} : memref<32x32xf32, #tpu.memory_space<vmem>>, vector<32x32xf32>,
    } else {
    }
    %9 = arith.extui %5 : i1 to i32
    %c0_i32_2 = arith.constant 0 : i32
    %10 = arith.cmpi ne, %9, %c0_i32_2 : i32
    scf.if %10 {
      %c0_3 = arith.constant 0 : index
      %c0_4 = arith.constant 0 : index
      %11 = vector.load %arg3[%c0_3, %c0_4] : memref<32x32xbf16, #tpu.memory_space<vmem>>, vector<32x32xbf16>
      %c0_5 = arith.constant 0 : index
      %c0_6 = arith.constant 0 : index
      %12 = vector.load %arg4[%c0_5, %c0_6] : memref<32x128xbf16, #tpu.memory_space<vmem>>, vector<32x128xbf16>
      %cst = arith.constant dense<0.000000e+00> : vector<32x128xf32>
      %13 = tpu.matmul %11, %12, %cst {dimension_numbers = #tpu.dot_dimension_numbers<[1], [0], [0], [1], [0, 0, 1, 1], [], []>} : vector<32x32xbf16>, vector<32x128xbf16>, vector<32x128xf32> -> vector<32x128xf32>
      %c0_7 = arith.constant 0 : index
      %c0_8 = arith.constant 0 : index
      %14 = vector.load %arg6[%c0_7, %c0_8] : memref<1x128xf32, #tpu.memory_space<vmem>>, vector<1x128xf32>
      %15 = vector.broadcast %14 : vector<1x128xf32> to vector<32x128xf32>
      %16 = arith.addf %13, %15 : vector<32x128xf32>
      %c0_9 = arith.constant 0 : index
      %c0_10 = arith.constant 0 : index
      %17 = vector.load %arg10[%c0_9, %c0_10] : memref<32x128xf32, #tpu.memory_space<vmem>>, vector<32x128xf32>
      tpu.vector_store %arg10[%c0_9, %c0_10], %16 {strides = array<i32>} : memref<32x128xf32, #tpu.memory_space<vmem>>, vector<32x128xf32>,
      %c0_11 = arith.constant 0 : index
      %c0_12 = arith.constant 0 : index
      %18 = vector.load %arg5[%c0_11, %c0_12] : memref<32x128xbf16, #tpu.memory_space<vmem>>, vector<32x128xbf16>
      %c0_13 = arith.constant 0 : index
      %c0_14 = arith.constant 0 : index
      %19 = vector.load %arg2[%c0_13, %c0_14] : memref<8x1xi32, #tpu.memory_space<vmem>>, vector<8x1xi32>
      %20 = vector.broadcast %0 : i32 to vector<8x1xi32>
      %21 = arith.subi %19, %20 : vector<8x1xi32>
      %c0_15 = arith.constant 0 : index
      %c0_16 = arith.constant 0 : index
      %22 = vector.load %arg8[%c0_15, %c0_16] : memref<8x32xf32, #tpu.memory_space<vmem>>, vector<8x32xf32>
      %c0_17 = arith.constant 0 : index
      %c0_18 = arith.constant 0 : index
      %23 = vector.load %arg9[%c0_17, %c0_18] : memref<8x32xf32, #tpu.memory_space<vmem>>, vector<8x32xf32>
      %c0_i32_19 = arith.constant 0 : i32
      %c8_i32 = arith.constant 8 : i32
      %24 = arith.muli %c0_i32_19, %c8_i32 : i32
      %25 = tpu.assume_multiple %24, 8 : i32
      %26 = arith.index_cast %25 : i32 to index
      %c0_20 = arith.constant 0 : index
      %27 = vector.load %arg10[%26, %c0_20] : memref<32x128xf32, #tpu.memory_space<vmem>>, vector<8x128xf32>
      %28 = arith.truncf %22 : vector<8x32xf32> to vector<8x32xbf16>
      %cst_21 = arith.constant dense<0.000000e+00> : vector<8x128xf32>
      %29 = tpu.matmul %28, %18, %cst_21 {dimension_numbers = #tpu.dot_dimension_numbers<[1], [0], [0], [1], [0, 0, 1, 1], [], []>} : vector<8x32xbf16>, vector<32x128xbf16>, vector<8x128xf32> -> vector<8x128xf32>
      %30 = arith.addf %27, %29 : vector<8x128xf32>
      %31 = vector.extract_strided_slice %30 {offsets = [0, 0], sizes = [8, 32], strides = [1, 1]} : vector<8x128xf32> to vector<8x32xf32>
      %32 = arith.negf %31 : vector<8x32xf32>
      %33 = math.exp %32 : vector<8x32xf32>
      %cst_22 = arith.constant 1.000000e+00 : f32
      %34 = vector.broadcast %cst_22 : f32 to vector<8x32xf32>
      %35 = arith.addf %34, %33 : vector<8x32xf32>
      %36 = arith.divf %34, %35 : vector<8x32xf32>
      %37 = vector.extract_strided_slice %30 {offsets = [0, 32], sizes = [8, 32], strides = [1, 1]} : vector<8x128xf32> to vector<8x32xf32>
      %38 = arith.negf %37 : vector<8x32xf32>
      %39 = math.exp %38 : vector<8x32xf32>
      %cst_23 = arith.constant 1.000000e+00 : f32
      %40 = vector.broadcast %cst_23 : f32 to vector<8x32xf32>
      %41 = arith.addf %40, %39 : vector<8x32xf32>
      %42 = arith.divf %40, %41 : vector<8x32xf32>
      %43 = vector.extract_strided_slice %30 {offsets = [0, 64], sizes = [8, 32], strides = [1, 1]} : vector<8x128xf32> to vector<8x32xf32>
      %44 = math.tanh %43 : vector<8x32xf32>
      %45 = vector.extract_strided_slice %30 {offsets = [0, 96], sizes = [8, 32], strides = [1, 1]} : vector<8x128xf32> to vector<8x32xf32>
      %46 = arith.negf %45 : vector<8x32xf32>
      %47 = math.exp %46 : vector<8x32xf32>
      %cst_24 = arith.constant 1.000000e+00 : f32
      %48 = vector.broadcast %cst_24 : f32 to vector<8x32xf32>
      %49 = arith.addf %48, %47 : vector<8x32xf32>
      %50 = arith.divf %48, %49 : vector<8x32xf32>
      %51 = arith.mulf %42, %23 : vector<8x32xf32>
      %52 = arith.mulf %36, %44 : vector<8x32xf32>
      %53 = arith.addf %51, %52 : vector<8x32xf32>
      %54 = math.tanh %53 : vector<8x32xf32>
      %55 = arith.mulf %50, %54 : vector<8x32xf32>
      %56 = vector.broadcast %c0_i32_19 : i32 to vector<8x1xi32>
      %57 = arith.cmpi slt, %56, %21 : vector<8x1xi32>
      %cst_25 = arith.constant 0.000000e+00 : f32
      %58 = vector.shape_cast %57 : vector<8x1xi1> to vector<8x1xi1>
      %59 = vector.broadcast %58 : vector<8x1xi1> to vector<8x32xi1>
      %60 = vector.broadcast %cst_25 : f32 to vector<8x32xf32>
      %61 = arith.select %59, %55, %60 : vector<8x32xi1>, vector<8x32xf32>
      %62 = arith.index_cast %25 : i32 to index
      %c0_26 = arith.constant 0 : index
      %63 = vector.load %arg7[%62, %c0_26] : memref<32x32xf32, #tpu.memory_space<vmem>>, vector<8x32xf32>
      tpu.vector_store %arg7[%62, %c0_26], %61 {strides = array<i32>} : memref<32x32xf32, #tpu.memory_space<vmem>>, vector<8x32xf32>,
      %c1_i32 = arith.constant 1 : i32
      %c8_i32_27 = arith.constant 8 : i32
      %64 = arith.muli %c1_i32, %c8_i32_27 : i32
      %65 = tpu.assume_multiple %64, 8 : i32
      %66 = arith.index_cast %65 : i32 to index
      %c0_28 = arith.constant 0 : index
      %67 = vector.load %arg10[%66, %c0_28] : memref<32x128xf32, #tpu.memory_space<vmem>>, vector<8x128xf32>
      %68 = arith.truncf %55 : vector<8x32xf32> to vector<8x32xbf16>
      %cst_29 = arith.constant dense<0.000000e+00> : vector<8x128xf32>
      %69 = tpu.matmul %68, %18, %cst_29 {dimension_numbers = #tpu.dot_dimension_numbers<[1], [0], [0], [1], [0, 0, 1, 1], [], []>} : vector<8x32xbf16>, vector<32x128xbf16>, vector<8x128xf32> -> vector<8x128xf32>
      %70 = arith.addf %67, %69 : vector<8x128xf32>
      %71 = vector.extract_strided_slice %70 {offsets = [0, 0], sizes = [8, 32], strides = [1, 1]} : vector<8x128xf32> to vector<8x32xf32>
      %72 = arith.negf %71 : vector<8x32xf32>
      %73 = math.exp %72 : vector<8x32xf32>
      %cst_30 = arith.constant 1.000000e+00 : f32
      %74 = vector.broadcast %cst_30 : f32 to vector<8x32xf32>
      %75 = arith.addf %74, %73 : vector<8x32xf32>
      %76 = arith.divf %74, %75 : vector<8x32xf32>
      %77 = vector.extract_strided_slice %70 {offsets = [0, 32], sizes = [8, 32], strides = [1, 1]} : vector<8x128xf32> to vector<8x32xf32>
      %78 = arith.negf %77 : vector<8x32xf32>
      %79 = math.exp %78 : vector<8x32xf32>
      %cst_31 = arith.constant 1.000000e+00 : f32
      %80 = vector.broadcast %cst_31 : f32 to vector<8x32xf32>
      %81 = arith.addf %80, %79 : vector<8x32xf32>
      %82 = arith.divf %80, %81 : vector<8x32xf32>
      %83 = vector.extract_strided_slice %70 {offsets = [0, 64], sizes = [8, 32], strides = [1, 1]} : vector<8x128xf32> to vector<8x32xf32>
      %84 = math.tanh %83 : vector<8x32xf32>
      %85 = vector.extract_strided_slice %70 {offsets = [0, 96], sizes = [8, 32], strides = [1, 1]} : vector<8x128xf32> to vector<8x32xf32>
      %86 = arith.negf %85 : vector<8x32xf32>
      %87 = math.exp %86 : vector<8x32xf32>
      %cst_32 = arith.constant 1.000000e+00 : f32
      %88 = vector.broadcast %cst_32 : f32 to vector<8x32xf32>
      %89 = arith.addf %88, %87 : vector<8x32xf32>
      %90 = arith.divf %88, %89 : vector<8x32xf32>
      %91 = arith.mulf %82, %53 : vector<8x32xf32>
      %92 = arith.mulf %76, %84 : vector<8x32xf32>
      %93 = arith.addf %91, %92 : vector<8x32xf32>
      %94 = math.tanh %93 : vector<8x32xf32>
      %95 = arith.mulf %90, %94 : vector<8x32xf32>
      %96 = vector.broadcast %c1_i32 : i32 to vector<8x1xi32>
      %97 = arith.cmpi slt, %96, %21 : vector<8x1xi32>
      %cst_33 = arith.constant 0.000000e+00 : f32
      %98 = vector.shape_cast %97 : vector<8x1xi1> to vector<8x1xi1>
      %99 = vector.broadcast %98 : vector<8x1xi1> to vector<8x32xi1>
      %100 = vector.broadcast %cst_33 : f32 to vector<8x32xf32>
      %101 = arith.select %99, %95, %100 : vector<8x32xi1>, vector<8x32xf32>
      %102 = arith.index_cast %65 : i32 to index
      %c0_34 = arith.constant 0 : index
      %103 = vector.load %arg7[%102, %c0_34] : memref<32x32xf32, #tpu.memory_space<vmem>>, vector<8x32xf32>
      tpu.vector_store %arg7[%102, %c0_34], %101 {strides = array<i32>} : memref<32x32xf32, #tpu.memory_space<vmem>>, vector<8x32xf32>,
      %c2_i32 = arith.constant 2 : i32
      %c8_i32_35 = arith.constant 8 : i32
      %104 = arith.muli %c2_i32, %c8_i32_35 : i32
      %105 = tpu.assume_multiple %104, 8 : i32
      %106 = arith.index_cast %105 : i32 to index
      %c0_36 = arith.constant 0 : index
      %107 = vector.load %arg10[%106, %c0_36] : memref<32x128xf32, #tpu.memory_space<vmem>>, vector<8x128xf32>
      %108 = arith.truncf %95 : vector<8x32xf32> to vector<8x32xbf16>
      %cst_37 = arith.constant dense<0.000000e+00> : vector<8x128xf32>
      %109 = tpu.matmul %108, %18, %cst_37 {dimension_numbers = #tpu.dot_dimension_numbers<[1], [0], [0], [1], [0, 0, 1, 1], [], []>} : vector<8x32xbf16>, vector<32x128xbf16>, vector<8x128xf32> -> vector<8x128xf32>
      %110 = arith.addf %107, %109 : vector<8x128xf32>
      %111 = vector.extract_strided_slice %110 {offsets = [0, 0], sizes = [8, 32], strides = [1, 1]} : vector<8x128xf32> to vector<8x32xf32>
      %112 = arith.negf %111 : vector<8x32xf32>
      %113 = math.exp %112 : vector<8x32xf32>
      %cst_38 = arith.constant 1.000000e+00 : f32
      %114 = vector.broadcast %cst_38 : f32 to vector<8x32xf32>
      %115 = arith.addf %114, %113 : vector<8x32xf32>
      %116 = arith.divf %114, %115 : vector<8x32xf32>
      %117 = vector.extract_strided_slice %110 {offsets = [0, 32], sizes = [8, 32], strides = [1, 1]} : vector<8x128xf32> to vector<8x32xf32>
      %118 = arith.negf %117 : vector<8x32xf32>
      %119 = math.exp %118 : vector<8x32xf32>
      %cst_39 = arith.constant 1.000000e+00 : f32
      %120 = vector.broadcast %cst_39 : f32 to vector<8x32xf32>
      %121 = arith.addf %120, %119 : vector<8x32xf32>
      %122 = arith.divf %120, %121 : vector<8x32xf32>
      %123 = vector.extract_strided_slice %110 {offsets = [0, 64], sizes = [8, 32], strides = [1, 1]} : vector<8x128xf32> to vector<8x32xf32>
      %124 = math.tanh %123 : vector<8x32xf32>
      %125 = vector.extract_strided_slice %110 {offsets = [0, 96], sizes = [8, 32], strides = [1, 1]} : vector<8x128xf32> to vector<8x32xf32>
      %126 = arith.negf %125 : vector<8x32xf32>
      %127 = math.exp %126 : vector<8x32xf32>
      %cst_40 = arith.constant 1.000000e+00 : f32
      %128 = vector.broadcast %cst_40 : f32 to vector<8x32xf32>
      %129 = arith.addf %128, %127 : vector<8x32xf32>
      %130 = arith.divf %128, %129 : vector<8x32xf32>
      %131 = arith.mulf %122, %93 : vector<8x32xf32>
      %132 = arith.mulf %116, %124 : vector<8x32xf32>
      %133 = arith.addf %131, %132 : vector<8x32xf32>
      %134 = math.tanh %133 : vector<8x32xf32>
      %135 = arith.mulf %130, %134 : vector<8x32xf32>
      %136 = vector.broadcast %c2_i32 : i32 to vector<8x1xi32>
      %137 = arith.cmpi slt, %136, %21 : vector<8x1xi32>
      %cst_41 = arith.constant 0.000000e+00 : f32
      %138 = vector.shape_cast %137 : vector<8x1xi1> to vector<8x1xi1>
      %139 = vector.broadcast %138 : vector<8x1xi1> to vector<8x32xi1>
      %140 = vector.broadcast %cst_41 : f32 to vector<8x32xf32>
      %141 = arith.select %139, %135, %140 : vector<8x32xi1>, vector<8x32xf32>
      %142 = arith.index_cast %105 : i32 to index
      %c0_42 = arith.constant 0 : index
      %143 = vector.load %arg7[%142, %c0_42] : memref<32x32xf32, #tpu.memory_space<vmem>>, vector<8x32xf32>
      tpu.vector_store %arg7[%142, %c0_42], %141 {strides = array<i32>} : memref<32x32xf32, #tpu.memory_space<vmem>>, vector<8x32xf32>,
      %c3_i32 = arith.constant 3 : i32
      %c8_i32_43 = arith.constant 8 : i32
      %144 = arith.muli %c3_i32, %c8_i32_43 : i32
      %145 = tpu.assume_multiple %144, 8 : i32
      %146 = arith.index_cast %145 : i32 to index
      %c0_44 = arith.constant 0 : index
      %147 = vector.load %arg10[%146, %c0_44] : memref<32x128xf32, #tpu.memory_space<vmem>>, vector<8x128xf32>
      %148 = arith.truncf %135 : vector<8x32xf32> to vector<8x32xbf16>
      %cst_45 = arith.constant dense<0.000000e+00> : vector<8x128xf32>
      %149 = tpu.matmul %148, %18, %cst_45 {dimension_numbers = #tpu.dot_dimension_numbers<[1], [0], [0], [1], [0, 0, 1, 1], [], []>} : vector<8x32xbf16>, vector<32x128xbf16>, vector<8x128xf32> -> vector<8x128xf32>
      %150 = arith.addf %147, %149 : vector<8x128xf32>
      %151 = vector.extract_strided_slice %150 {offsets = [0, 0], sizes = [8, 32], strides = [1, 1]} : vector<8x128xf32> to vector<8x32xf32>
      %152 = arith.negf %151 : vector<8x32xf32>
      %153 = math.exp %152 : vector<8x32xf32>
      %cst_46 = arith.constant 1.000000e+00 : f32
      %154 = vector.broadcast %cst_46 : f32 to vector<8x32xf32>
      %155 = arith.addf %154, %153 : vector<8x32xf32>
      %156 = arith.divf %154, %155 : vector<8x32xf32>
      %157 = vector.extract_strided_slice %150 {offsets = [0, 32], sizes = [8, 32], strides = [1, 1]} : vector<8x128xf32> to vector<8x32xf32>
      %158 = arith.negf %157 : vector<8x32xf32>
      %159 = math.exp %158 : vector<8x32xf32>
      %cst_47 = arith.constant 1.000000e+00 : f32
      %160 = vector.broadcast %cst_47 : f32 to vector<8x32xf32>
      %161 = arith.addf %160, %159 : vector<8x32xf32>
      %162 = arith.divf %160, %161 : vector<8x32xf32>
      %163 = vector.extract_strided_slice %150 {offsets = [0, 64], sizes = [8, 32], strides = [1, 1]} : vector<8x128xf32> to vector<8x32xf32>
      %164 = math.tanh %163 : vector<8x32xf32>
      %165 = vector.extract_strided_slice %150 {offsets = [0, 96], sizes = [8, 32], strides = [1, 1]} : vector<8x128xf32> to vector<8x32xf32>
      %166 = arith.negf %165 : vector<8x32xf32>
      %167 = math.exp %166 : vector<8x32xf32>
      %cst_48 = arith.constant 1.000000e+00 : f32
      %168 = vector.broadcast %cst_48 : f32 to vector<8x32xf32>
      %169 = arith.addf %168, %167 : vector<8x32xf32>
      %170 = arith.divf %168, %169 : vector<8x32xf32>
      %171 = arith.mulf %162, %133 : vector<8x32xf32>
      %172 = arith.mulf %156, %164 : vector<8x32xf32>
      %173 = arith.addf %171, %172 : vector<8x32xf32>
      %174 = math.tanh %173 : vector<8x32xf32>
      %175 = arith.mulf %170, %174 : vector<8x32xf32>
      %176 = vector.broadcast %c3_i32 : i32 to vector<8x1xi32>
      %177 = arith.cmpi slt, %176, %21 : vector<8x1xi32>
      %cst_49 = arith.constant 0.000000e+00 : f32
      %178 = vector.shape_cast %177 : vector<8x1xi1> to vector<8x1xi1>
      %179 = vector.broadcast %178 : vector<8x1xi1> to vector<8x32xi1>
      %180 = vector.broadcast %cst_49 : f32 to vector<8x32xf32>
      %181 = arith.select %179, %175, %180 : vector<8x32xi1>, vector<8x32xf32>
      %182 = arith.index_cast %145 : i32 to index
      %c0_50 = arith.constant 0 : index
      %183 = vector.load %arg7[%182, %c0_50] : memref<32x32xf32, #tpu.memory_space<vmem>>, vector<8x32xf32>
      tpu.vector_store %arg7[%182, %c0_50], %181 {strides = array<i32>} : memref<32x32xf32, #tpu.memory_space<vmem>>, vector<8x32xf32>,
      %c4_i32_51 = arith.constant 4 : i32
      %c0_52 = arith.constant 0 : index
      %c0_53 = arith.constant 0 : index
      %184 = vector.load %arg8[%c0_52, %c0_53] : memref<8x32xf32, #tpu.memory_space<vmem>>, vector<8x32xf32>
      tpu.vector_store %arg8[%c0_52, %c0_53], %175 {strides = array<i32>} : memref<8x32xf32, #tpu.memory_space<vmem>>, vector<8x32xf32>,
      %c0_54 = arith.constant 0 : index
      %c0_55 = arith.constant 0 : index
      %185 = vector.load %arg9[%c0_54, %c0_55] : memref<8x32xf32, #tpu.memory_space<vmem>>, vector<8x32xf32>
      tpu.vector_store %arg9[%c0_54, %c0_55], %173 {strides = array<i32>} : memref<8x32xf32, #tpu.memory_space<vmem>>, vector<8x32xf32>,
    } else {
    }
    return
  }
  func.func @transform_0(%arg0: i32, %arg1: memref<1xi32, #tpu.memory_space<smem>>) -> (i32, i32) {
    %c0_i32 = arith.constant 0 : i32
    %c0_i32_0 = arith.constant 0 : i32
    %c0_i32_1 = arith.constant 0 : i32
    return %c0_i32, %c0_i32_0 : i32, i32
  }
  func.func @transform_1(%arg0: i32, %arg1: memref<1xi32, #tpu.memory_space<smem>>) -> (i32, i32) {
    %c0_i32 = arith.constant 0 : i32
    %c0_i32_0 = arith.constant 0 : i32
    return %arg0, %c0_i32 : i32, i32
  }
  func.func @transform_2(%arg0: i32, %arg1: memref<1xi32, #tpu.memory_space<smem>>) -> (i32, i32) {
    %c0_i32 = arith.constant 0 : i32
    %c0_i32_0 = arith.constant 0 : i32
    %c0_i32_1 = arith.constant 0 : i32
    return %c0_i32, %c0_i32_0 : i32, i32
  }
  func.func @transform_3(%arg0: i32, %arg1: memref<1xi32, #tpu.memory_space<smem>>) -> (i32, i32) {
    %c0_i32 = arith.constant 0 : i32
    %c0_i32_0 = arith.constant 0 : i32
    %c0_i32_1 = arith.constant 0 : i32
    return %c0_i32, %c0_i32_0 : i32, i32
  }
  func.func @transform_4(%arg0: i32, %arg1: memref<1xi32, #tpu.memory_space<smem>>) -> (i32, i32) {
    %c0_i32 = arith.constant 0 : i32
    %c0_i32_0 = arith.constant 0 : i32
    %c0_i32_1 = arith.constant 0 : i32
    return %c0_i32, %c0_i32_0 : i32, i32
  }
  func.func @transform_5(%arg0: i32, %arg1: memref<1xi32, #tpu.memory_space<smem>>) -> (i32, i32) {
    %c0_i32 = arith.constant 0 : i32
    %c0_i32_0 = arith.constant 0 : i32
    return %arg0, %c0_i32 : i32, i32
  }
}

module attributes {stable_mosaic.version = 11 : i64} {
  func.func @_lstm_chunk_kernel(%arg0: i32, %arg1: memref<1xi32, #tpu.memory_space<smem>>, %arg2: memref<8x1xi32, #tpu.memory_space<vmem>>, %arg3: memref<32x32xbf16, #tpu.memory_space<vmem>>, %arg4: memref<32x128xbf16, #tpu.memory_space<vmem>>, %arg5: memref<32x128xbf16, #tpu.memory_space<vmem>>, %arg6: memref<1x128xf32, #tpu.memory_space<vmem>>, %arg7: memref<32x32xf32, #tpu.memory_space<vmem>>, %arg8: memref<8x32xf32, #tpu.memory_space<vmem>>, %arg9: memref<8x32xf32, #tpu.memory_space<vmem>>, %arg10: memref<32x128xf32, #tpu.memory_space<vmem>>) attributes {dimension_semantics = [#tpu.dimension_semantics<arbitrary>], iteration_bounds = array<i64: 3>, scalar_prefetch = 1 : i64, scratch_operands = 3 : i64, tpu.core_type = #tpu.core_type<tc>, window_params = [{pipeline_mode = #tpu.pipeline_mode<synchronous>, transform_indices = @transform_0, window_bounds = array<i64: 8, 1>}, {transform_indices = @transform_1, window_bounds = array<i64: 32, 32>}, {pipeline_mode = #tpu.pipeline_mode<synchronous>, transform_indices = @transform_2, window_bounds = array<i64: 32, 128>}, {pipeline_mode = #tpu.pipeline_mode<synchronous>, transform_indices = @transform_3, window_bounds = array<i64: 32, 128>}, {pipeline_mode = #tpu.pipeline_mode<synchronous>, transform_indices = @transform_4, window_bounds = array<i64: 1, 128>}, {transform_indices = @transform_5, window_bounds = array<i64: 32, 32>}]} {
    %c4_i32 = arith.constant 4 : i32
    %0 = arith.muli %arg0, %c4_i32 : i32
    %c0_i32 = arith.constant 0 : i32
    %1 = arith.cmpi eq, %arg0, %c0_i32 : i32
    %2 = arith.extui %1 : i1 to i32
    %c0_i32_0 = arith.constant 0 : i32
    %3 = arith.cmpi ne, %2, %c0_i32_0 : i32
    scf.if %3 {
      %cst = arith.constant 0.000000e+00 : f32
      %11 = vector.broadcast %cst : f32 to vector<8x32xf32>
      %c0_3 = arith.constant 0 : index
      %c0_4 = arith.constant 0 : index
      %12 = vector.load %arg8[%c0_3, %c0_4] : memref<8x32xf32, #tpu.memory_space<vmem>>, vector<8x32xf32>
      tpu.vector_store %arg8[%c0_3, %c0_4], %11 {strides = array<i32>} : memref<8x32xf32, #tpu.memory_space<vmem>>, vector<8x32xf32>,
      %cst_5 = arith.constant 0.000000e+00 : f32
      %13 = vector.broadcast %cst_5 : f32 to vector<8x32xf32>
      %c0_6 = arith.constant 0 : index
      %c0_7 = arith.constant 0 : index
      %14 = vector.load %arg9[%c0_6, %c0_7] : memref<8x32xf32, #tpu.memory_space<vmem>>, vector<8x32xf32>
      tpu.vector_store %arg9[%c0_6, %c0_7], %13 {strides = array<i32>} : memref<8x32xf32, #tpu.memory_space<vmem>>, vector<8x32xf32>,
    } else {
    }
    %c0 = arith.constant 0 : index
    %4 = memref.load %arg1[%c0] : memref<1xi32, #tpu.memory_space<smem>>
    %5 = arith.cmpi slt, %0, %4 : i32
    %true = arith.constant true
    %6 = arith.xori %5, %true : i1
    %7 = arith.extui %6 : i1 to i32
    %c0_i32_1 = arith.constant 0 : i32
    %8 = arith.cmpi ne, %7, %c0_i32_1 : i32
    scf.if %8 {
      %cst = arith.constant 0.000000e+00 : f32
      %11 = vector.broadcast %cst : f32 to vector<32x32xf32>
      %c0_3 = arith.constant 0 : index
      %c0_4 = arith.constant 0 : index
      %12 = vector.load %arg7[%c0_3, %c0_4] : memref<32x32xf32, #tpu.memory_space<vmem>>, vector<32x32xf32>
      tpu.vector_store %arg7[%c0_3, %c0_4], %11 {strides = array<i32>} : memref<32x32xf32, #tpu.memory_space<vmem>>, vector<32x32xf32>,
    } else {
    }
    %9 = arith.extui %5 : i1 to i32
    %c0_i32_2 = arith.constant 0 : i32
    %10 = arith.cmpi ne, %9, %c0_i32_2 : i32
    scf.if %10 {
      %c0_3 = arith.constant 0 : index
      %c0_4 = arith.constant 0 : index
      %11 = vector.load %arg3[%c0_3, %c0_4] : memref<32x32xbf16, #tpu.memory_space<vmem>>, vector<32x32xbf16>
      %c0_5 = arith.constant 0 : index
      %c0_6 = arith.constant 0 : index
      %12 = vector.load %arg4[%c0_5, %c0_6] : memref<32x128xbf16, #tpu.memory_space<vmem>>, vector<32x128xbf16>
      %cst = arith.constant dense<0.000000e+00> : vector<32x128xf32>
      %13 = tpu.matmul %11, %12, %cst {dimension_numbers = #tpu.dot_dimension_numbers<[1], [0], [0], [1], [0, 0, 1, 1], [], []>} : vector<32x32xbf16>, vector<32x128xbf16>, vector<32x128xf32> -> vector<32x128xf32>
      %c0_7 = arith.constant 0 : index
      %c0_8 = arith.constant 0 : index
      %14 = vector.load %arg6[%c0_7, %c0_8] : memref<1x128xf32, #tpu.memory_space<vmem>>, vector<1x128xf32>
      %15 = vector.broadcast %14 : vector<1x128xf32> to vector<32x128xf32>
      %16 = arith.addf %13, %15 : vector<32x128xf32>
      %c0_9 = arith.constant 0 : index
      %c0_10 = arith.constant 0 : index
      %17 = vector.load %arg10[%c0_9, %c0_10] : memref<32x128xf32, #tpu.memory_space<vmem>>, vector<32x128xf32>
      tpu.vector_store %arg10[%c0_9, %c0_10], %16 {strides = array<i32>} : memref<32x128xf32, #tpu.memory_space<vmem>>, vector<32x128xf32>,
      %c0_11 = arith.constant 0 : index
      %c0_12 = arith.constant 0 : index
      %18 = vector.load %arg5[%c0_11, %c0_12] : memref<32x128xbf16, #tpu.memory_space<vmem>>, vector<32x128xbf16>
      %c0_13 = arith.constant 0 : index
      %c0_14 = arith.constant 0 : index
      %19 = vector.load %arg2[%c0_13, %c0_14] : memref<8x1xi32, #tpu.memory_space<vmem>>, vector<8x1xi32>
      %20 = vector.broadcast %0 : i32 to vector<8x1xi32>
      %21 = arith.subi %19, %20 : vector<8x1xi32>
      %c0_15 = arith.constant 0 : index
      %c0_16 = arith.constant 0 : index
      %22 = vector.load %arg8[%c0_15, %c0_16] : memref<8x32xf32, #tpu.memory_space<vmem>>, vector<8x32xf32>
      %c0_17 = arith.constant 0 : index
      %c0_18 = arith.constant 0 : index
      %23 = vector.load %arg9[%c0_17, %c0_18] : memref<8x32xf32, #tpu.memory_space<vmem>>, vector<8x32xf32>
      %c0_i32_19 = arith.constant 0 : i32
      %c8_i32 = arith.constant 8 : i32
      %24 = arith.muli %c0_i32_19, %c8_i32 : i32
      %25 = tpu.assume_multiple %24, 8 : i32
      %26 = arith.index_cast %25 : i32 to index
      %c0_20 = arith.constant 0 : index
      %27 = vector.load %arg10[%26, %c0_20] : memref<32x128xf32, #tpu.memory_space<vmem>>, vector<8x128xf32>
      %28 = arith.truncf %22 : vector<8x32xf32> to vector<8x32xbf16>
      %cst_21 = arith.constant dense<0.000000e+00> : vector<8x128xf32>
      %29 = tpu.matmul %28, %18, %cst_21 {dimension_numbers = #tpu.dot_dimension_numbers<[1], [0], [0], [1], [0, 0, 1, 1], [], []>} : vector<8x32xbf16>, vector<32x128xbf16>, vector<8x128xf32> -> vector<8x128xf32>
      %30 = arith.addf %27, %29 : vector<8x128xf32>
      %31 = vector.extract_strided_slice %30 {offsets = [0, 0], sizes = [8, 32], strides = [1, 1]} : vector<8x128xf32> to vector<8x32xf32>
      %32 = arith.negf %31 : vector<8x32xf32>
      %33 = math.exp %32 : vector<8x32xf32>
      %cst_22 = arith.constant 1.000000e+00 : f32
      %34 = vector.broadcast %cst_22 : f32 to vector<8x32xf32>
      %35 = arith.addf %34, %33 : vector<8x32xf32>
      %36 = arith.divf %34, %35 : vector<8x32xf32>
      %37 = vector.extract_strided_slice %30 {offsets = [0, 32], sizes = [8, 32], strides = [1, 1]} : vector<8x128xf32> to vector<8x32xf32>
      %38 = arith.negf %37 : vector<8x32xf32>
      %39 = math.exp %38 : vector<8x32xf32>
      %cst_23 = arith.constant 1.000000e+00 : f32
      %40 = vector.broadcast %cst_23 : f32 to vector<8x32xf32>
      %41 = arith.addf %40, %39 : vector<8x32xf32>
      %42 = arith.divf %40, %41 : vector<8x32xf32>
      %43 = vector.extract_strided_slice %30 {offsets = [0, 64], sizes = [8, 32], strides = [1, 1]} : vector<8x128xf32> to vector<8x32xf32>
      %44 = math.tanh %43 : vector<8x32xf32>
      %45 = vector.extract_strided_slice %30 {offsets = [0, 96], sizes = [8, 32], strides = [1, 1]} : vector<8x128xf32> to vector<8x32xf32>
      %46 = arith.negf %45 : vector<8x32xf32>
      %47 = math.exp %46 : vector<8x32xf32>
      %cst_24 = arith.constant 1.000000e+00 : f32
      %48 = vector.broadcast %cst_24 : f32 to vector<8x32xf32>
      %49 = arith.addf %48, %47 : vector<8x32xf32>
      %50 = arith.divf %48, %49 : vector<8x32xf32>
      %51 = arith.mulf %42, %23 : vector<8x32xf32>
      %52 = arith.mulf %36, %44 : vector<8x32xf32>
      %53 = arith.addf %51, %52 : vector<8x32xf32>
      %54 = math.tanh %53 : vector<8x32xf32>
      %55 = arith.mulf %50, %54 : vector<8x32xf32>
      %56 = vector.broadcast %c0_i32_19 : i32 to vector<8x1xi32>
      %57 = arith.cmpi slt, %56, %21 : vector<8x1xi32>
      %cst_25 = arith.constant 0.000000e+00 : f32
      %58 = vector.shape_cast %57 : vector<8x1xi1> to vector<8x1xi1>
      %59 = vector.broadcast %58 : vector<8x1xi1> to vector<8x32xi1>
      %60 = vector.broadcast %cst_25 : f32 to vector<8x32xf32>
      %61 = arith.select %59, %55, %60 : vector<8x32xi1>, vector<8x32xf32>
      %62 = arith.index_cast %25 : i32 to index
      %c0_26 = arith.constant 0 : index
      %63 = vector.load %arg7[%62, %c0_26] : memref<32x32xf32, #tpu.memory_space<vmem>>, vector<8x32xf32>
      tpu.vector_store %arg7[%62, %c0_26], %61 {strides = array<i32>} : memref<32x32xf32, #tpu.memory_space<vmem>>, vector<8x32xf32>,
      %c1_i32 = arith.constant 1 : i32
      %c8_i32_27 = arith.constant 8 : i32
      %64 = arith.muli %c1_i32, %c8_i32_27 : i32
      %65 = tpu.assume_multiple %64, 8 : i32
      %66 = arith.index_cast %65 : i32 to index
      %c0_28 = arith.constant 0 : index
      %67 = vector.load %arg10[%66, %c0_28] : memref<32x128xf32, #tpu.memory_space<vmem>>, vector<8x128xf32>
      %68 = arith.truncf %55 : vector<8x32xf32> to vector<8x32xbf16>
      %cst_29 = arith.constant dense<0.000000e+00> : vector<8x128xf32>
      %69 = tpu.matmul %68, %18, %cst_29 {dimension_numbers = #tpu.dot_dimension_numbers<[1], [0], [0], [1], [0, 0, 1, 1], [], []>} : vector<8x32xbf16>, vector<32x128xbf16>, vector<8x128xf32> -> vector<8x128xf32>
      %70 = arith.addf %67, %69 : vector<8x128xf32>
      %71 = vector.extract_strided_slice %70 {offsets = [0, 0], sizes = [8, 32], strides = [1, 1]} : vector<8x128xf32> to vector<8x32xf32>
      %72 = arith.negf %71 : vector<8x32xf32>
      %73 = math.exp %72 : vector<8x32xf32>
      %cst_30 = arith.constant 1.000000e+00 : f32
      %74 = vector.broadcast %cst_30 : f32 to vector<8x32xf32>
      %75 = arith.addf %74, %73 : vector<8x32xf32>
      %76 = arith.divf %74, %75 : vector<8x32xf32>
      %77 = vector.extract_strided_slice %70 {offsets = [0, 32], sizes = [8, 32], strides = [1, 1]} : vector<8x128xf32> to vector<8x32xf32>
      %78 = arith.negf %77 : vector<8x32xf32>
      %79 = math.exp %78 : vector<8x32xf32>
      %cst_31 = arith.constant 1.000000e+00 : f32
      %80 = vector.broadcast %cst_31 : f32 to vector<8x32xf32>
      %81 = arith.addf %80, %79 : vector<8x32xf32>
      %82 = arith.divf %80, %81 : vector<8x32xf32>
      %83 = vector.extract_strided_slice %70 {offsets = [0, 64], sizes = [8, 32], strides = [1, 1]} : vector<8x128xf32> to vector<8x32xf32>
      %84 = math.tanh %83 : vector<8x32xf32>
      %85 = vector.extract_strided_slice %70 {offsets = [0, 96], sizes = [8, 32], strides = [1, 1]} : vector<8x128xf32> to vector<8x32xf32>
      %86 = arith.negf %85 : vector<8x32xf32>
      %87 = math.exp %86 : vector<8x32xf32>
      %cst_32 = arith.constant 1.000000e+00 : f32
      %88 = vector.broadcast %cst_32 : f32 to vector<8x32xf32>
      %89 = arith.addf %88, %87 : vector<8x32xf32>
      %90 = arith.divf %88, %89 : vector<8x32xf32>
      %91 = arith.mulf %82, %53 : vector<8x32xf32>
      %92 = arith.mulf %76, %84 : vector<8x32xf32>
      %93 = arith.addf %91, %92 : vector<8x32xf32>
      %94 = math.tanh %93 : vector<8x32xf32>
      %95 = arith.mulf %90, %94 : vector<8x32xf32>
      %96 = vector.broadcast %c1_i32 : i32 to vector<8x1xi32>
      %97 = arith.cmpi slt, %96, %21 : vector<8x1xi32>
      %cst_33 = arith.constant 0.000000e+00 : f32
      %98 = vector.shape_cast %97 : vector<8x1xi1> to vector<8x1xi1>
      %99 = vector.broadcast %98 : vector<8x1xi1> to vector<8x32xi1>
      %100 = vector.broadcast %cst_33 : f32 to vector<8x32xf32>
      %101 = arith.select %99, %95, %100 : vector<8x32xi1>, vector<8x32xf32>
      %102 = arith.index_cast %65 : i32 to index
      %c0_34 = arith.constant 0 : index
      %103 = vector.load %arg7[%102, %c0_34] : memref<32x32xf32, #tpu.memory_space<vmem>>, vector<8x32xf32>
      tpu.vector_store %arg7[%102, %c0_34], %101 {strides = array<i32>} : memref<32x32xf32, #tpu.memory_space<vmem>>, vector<8x32xf32>,
      %c2_i32 = arith.constant 2 : i32
      %c8_i32_35 = arith.constant 8 : i32
      %104 = arith.muli %c2_i32, %c8_i32_35 : i32
      %105 = tpu.assume_multiple %104, 8 : i32
      %106 = arith.index_cast %105 : i32 to index
      %c0_36 = arith.constant 0 : index
      %107 = vector.load %arg10[%106, %c0_36] : memref<32x128xf32, #tpu.memory_space<vmem>>, vector<8x128xf32>
      %108 = arith.truncf %95 : vector<8x32xf32> to vector<8x32xbf16>
      %cst_37 = arith.constant dense<0.000000e+00> : vector<8x128xf32>
      %109 = tpu.matmul %108, %18, %cst_37 {dimension_numbers = #tpu.dot_dimension_numbers<[1], [0], [0], [1], [0, 0, 1, 1], [], []>} : vector<8x32xbf16>, vector<32x128xbf16>, vector<8x128xf32> -> vector<8x128xf32>
      %110 = arith.addf %107, %109 : vector<8x128xf32>
      %111 = vector.extract_strided_slice %110 {offsets = [0, 0], sizes = [8, 32], strides = [1, 1]} : vector<8x128xf32> to vector<8x32xf32>
      %112 = arith.negf %111 : vector<8x32xf32>
      %113 = math.exp %112 : vector<8x32xf32>
      %cst_38 = arith.constant 1.000000e+00 : f32
      %114 = vector.broadcast %cst_38 : f32 to vector<8x32xf32>
      %115 = arith.addf %114, %113 : vector<8x32xf32>
      %116 = arith.divf %114, %115 : vector<8x32xf32>
      %117 = vector.extract_strided_slice %110 {offsets = [0, 32], sizes = [8, 32], strides = [1, 1]} : vector<8x128xf32> to vector<8x32xf32>
      %118 = arith.negf %117 : vector<8x32xf32>
      %119 = math.exp %118 : vector<8x32xf32>
      %cst_39 = arith.constant 1.000000e+00 : f32
      %120 = vector.broadcast %cst_39 : f32 to vector<8x32xf32>
      %121 = arith.addf %120, %119 : vector<8x32xf32>
      %122 = arith.divf %120, %121 : vector<8x32xf32>
      %123 = vector.extract_strided_slice %110 {offsets = [0, 64], sizes = [8, 32], strides = [1, 1]} : vector<8x128xf32> to vector<8x32xf32>
      %124 = math.tanh %123 : vector<8x32xf32>
      %125 = vector.extract_strided_slice %110 {offsets = [0, 96], sizes = [8, 32], strides = [1, 1]} : vector<8x128xf32> to vector<8x32xf32>
      %126 = arith.negf %125 : vector<8x32xf32>
      %127 = math.exp %126 : vector<8x32xf32>
      %cst_40 = arith.constant 1.000000e+00 : f32
      %128 = vector.broadcast %cst_40 : f32 to vector<8x32xf32>
      %129 = arith.addf %128, %127 : vector<8x32xf32>
      %130 = arith.divf %128, %129 : vector<8x32xf32>
      %131 = arith.mulf %122, %93 : vector<8x32xf32>
      %132 = arith.mulf %116, %124 : vector<8x32xf32>
      %133 = arith.addf %131, %132 : vector<8x32xf32>
      %134 = math.tanh %133 : vector<8x32xf32>
      %135 = arith.mulf %130, %134 : vector<8x32xf32>
      %136 = vector.broadcast %c2_i32 : i32 to vector<8x1xi32>
      %137 = arith.cmpi slt, %136, %21 : vector<8x1xi32>
      %cst_41 = arith.constant 0.000000e+00 : f32
      %138 = vector.shape_cast %137 : vector<8x1xi1> to vector<8x1xi1>
      %139 = vector.broadcast %138 : vector<8x1xi1> to vector<8x32xi1>
      %140 = vector.broadcast %cst_41 : f32 to vector<8x32xf32>
      %141 = arith.select %139, %135, %140 : vector<8x32xi1>, vector<8x32xf32>
      %142 = arith.index_cast %105 : i32 to index
      %c0_42 = arith.constant 0 : index
      %143 = vector.load %arg7[%142, %c0_42] : memref<32x32xf32, #tpu.memory_space<vmem>>, vector<8x32xf32>
      tpu.vector_store %arg7[%142, %c0_42], %141 {strides = array<i32>} : memref<32x32xf32, #tpu.memory_space<vmem>>, vector<8x32xf32>,
      %c3_i32 = arith.constant 3 : i32
      %c8_i32_43 = arith.constant 8 : i32
      %144 = arith.muli %c3_i32, %c8_i32_43 : i32
      %145 = tpu.assume_multiple %144, 8 : i32
      %146 = arith.index_cast %145 : i32 to index
      %c0_44 = arith.constant 0 : index
      %147 = vector.load %arg10[%146, %c0_44] : memref<32x128xf32, #tpu.memory_space<vmem>>, vector<8x128xf32>
      %148 = arith.truncf %135 : vector<8x32xf32> to vector<8x32xbf16>
      %cst_45 = arith.constant dense<0.000000e+00> : vector<8x128xf32>
      %149 = tpu.matmul %148, %18, %cst_45 {dimension_numbers = #tpu.dot_dimension_numbers<[1], [0], [0], [1], [0, 0, 1, 1], [], []>} : vector<8x32xbf16>, vector<32x128xbf16>, vector<8x128xf32> -> vector<8x128xf32>
      %150 = arith.addf %147, %149 : vector<8x128xf32>
      %151 = vector.extract_strided_slice %150 {offsets = [0, 0], sizes = [8, 32], strides = [1, 1]} : vector<8x128xf32> to vector<8x32xf32>
      %152 = arith.negf %151 : vector<8x32xf32>
      %153 = math.exp %152 : vector<8x32xf32>
      %cst_46 = arith.constant 1.000000e+00 : f32
      %154 = vector.broadcast %cst_46 : f32 to vector<8x32xf32>
      %155 = arith.addf %154, %153 : vector<8x32xf32>
      %156 = arith.divf %154, %155 : vector<8x32xf32>
      %157 = vector.extract_strided_slice %150 {offsets = [0, 32], sizes = [8, 32], strides = [1, 1]} : vector<8x128xf32> to vector<8x32xf32>
      %158 = arith.negf %157 : vector<8x32xf32>
      %159 = math.exp %158 : vector<8x32xf32>
      %cst_47 = arith.constant 1.000000e+00 : f32
      %160 = vector.broadcast %cst_47 : f32 to vector<8x32xf32>
      %161 = arith.addf %160, %159 : vector<8x32xf32>
      %162 = arith.divf %160, %161 : vector<8x32xf32>
      %163 = vector.extract_strided_slice %150 {offsets = [0, 64], sizes = [8, 32], strides = [1, 1]} : vector<8x128xf32> to vector<8x32xf32>
      %164 = math.tanh %163 : vector<8x32xf32>
      %165 = vector.extract_strided_slice %150 {offsets = [0, 96], sizes = [8, 32], strides = [1, 1]} : vector<8x128xf32> to vector<8x32xf32>
      %166 = arith.negf %165 : vector<8x32xf32>
      %167 = math.exp %166 : vector<8x32xf32>
      %cst_48 = arith.constant 1.000000e+00 : f32
      %168 = vector.broadcast %cst_48 : f32 to vector<8x32xf32>
      %169 = arith.addf %168, %167 : vector<8x32xf32>
      %170 = arith.divf %168, %169 : vector<8x32xf32>
      %171 = arith.mulf %162, %133 : vector<8x32xf32>
      %172 = arith.mulf %156, %164 : vector<8x32xf32>
      %173 = arith.addf %171, %172 : vector<8x32xf32>
      %174 = math.tanh %173 : vector<8x32xf32>
      %175 = arith.mulf %170, %174 : vector<8x32xf32>
      %176 = vector.broadcast %c3_i32 : i32 to vector<8x1xi32>
      %177 = arith.cmpi slt, %176, %21 : vector<8x1xi32>
      %cst_49 = arith.constant 0.000000e+00 : f32
      %178 = vector.shape_cast %177 : vector<8x1xi1> to vector<8x1xi1>
      %179 = vector.broadcast %178 : vector<8x1xi1> to vector<8x32xi1>
      %180 = vector.broadcast %cst_49 : f32 to vector<8x32xf32>
      %181 = arith.select %179, %175, %180 : vector<8x32xi1>, vector<8x32xf32>
      %182 = arith.index_cast %145 : i32 to index
      %c0_50 = arith.constant 0 : index
      %183 = vector.load %arg7[%182, %c0_50] : memref<32x32xf32, #tpu.memory_space<vmem>>, vector<8x32xf32>
      tpu.vector_store %arg7[%182, %c0_50], %181 {strides = array<i32>} : memref<32x32xf32, #tpu.memory_space<vmem>>, vector<8x32xf32>,
      %c4_i32_51 = arith.constant 4 : i32
      %c0_52 = arith.constant 0 : index
      %c0_53 = arith.constant 0 : index
      %184 = vector.load %arg8[%c0_52, %c0_53] : memref<8x32xf32, #tpu.memory_space<vmem>>, vector<8x32xf32>
      tpu.vector_store %arg8[%c0_52, %c0_53], %175 {strides = array<i32>} : memref<8x32xf32, #tpu.memory_space<vmem>>, vector<8x32xf32>,
      %c0_54 = arith.constant 0 : index
      %c0_55 = arith.constant 0 : index
      %185 = vector.load %arg9[%c0_54, %c0_55] : memref<8x32xf32, #tpu.memory_space<vmem>>, vector<8x32xf32>
      tpu.vector_store %arg9[%c0_54, %c0_55], %173 {strides = array<i32>} : memref<8x32xf32, #tpu.memory_space<vmem>>, vector<8x32xf32>,
    } else {
    }
    return
  }
  func.func @transform_0(%arg0: i32, %arg1: memref<1xi32, #tpu.memory_space<smem>>) -> (i32, i32) {
    %c0_i32 = arith.constant 0 : i32
    %c0_i32_0 = arith.constant 0 : i32
    %c0_i32_1 = arith.constant 0 : i32
    return %c0_i32, %c0_i32_0 : i32, i32
  }
  func.func @transform_1(%arg0: i32, %arg1: memref<1xi32, #tpu.memory_space<smem>>) -> (i32, i32) {
    %c0_i32 = arith.constant 0 : i32
    %c0_i32_0 = arith.constant 0 : i32
    return %arg0, %c0_i32 : i32, i32
  }
  func.func @transform_2(%arg0: i32, %arg1: memref<1xi32, #tpu.memory_space<smem>>) -> (i32, i32) {
    %c0_i32 = arith.constant 0 : i32
    %c0_i32_0 = arith.constant 0 : i32
    %c0_i32_1 = arith.constant 0 : i32
    return %c0_i32, %c0_i32_0 : i32, i32
  }
  func.func @transform_3(%arg0: i32, %arg1: memref<1xi32, #tpu.memory_space<smem>>) -> (i32, i32) {
    %c0_i32 = arith.constant 0 : i32
    %c0_i32_0 = arith.constant 0 : i32
    %c0_i32_1 = arith.constant 0 : i32
    return %c0_i32, %c0_i32_0 : i32, i32
  }
  func.func @transform_4(%arg0: i32, %arg1: memref<1xi32, #tpu.memory_space<smem>>) -> (i32, i32) {
    %c0_i32 = arith.constant 0 : i32
    %c0_i32_0 = arith.constant 0 : i32
    %c0_i32_1 = arith.constant 0 : i32
    return %c0_i32, %c0_i32_0 : i32, i32
  }
  func.func @transform_5(%arg0: i32, %arg1: memref<1xi32, #tpu.memory_space<smem>>) -> (i32, i32) {
    %c0_i32 = arith.constant 0 : i32
    %c0_i32_0 = arith.constant 0 : i32
    return %arg0, %c0_i32 : i32, i32
  }
}

</mosaic_0001>

<llo_original>
// kernel: _lstm_pallas.1
$region0: #{_lstm_pallas.1}
  #allocation0 [shape = 'u32[]', space=smem, size = 0x4, offset = 0x4, fixed_abs, tag = 'smem constant byte address 0x4 - core index']
  #allocation1 [shape = 'u32[144,128]{1,0:T(1,128)}', space=vmem, size = 0x12000, scoped, tag = 'internal scratch']
  #allocation2 [shape = 'f32[8,32]{1,0:T(8,128)}', space=vmem, size = 0x1000, scoped, tag = 'scratch operand']
  #allocation3 [shape = 'f32[8,32]{1,0:T(8,128)}', space=vmem, size = 0x1000, scoped, tag = 'scratch operand']
  #allocation4 [shape = 'f32[32,128]{1,0:T(8,128)}', space=vmem, size = 0x4000, scoped, tag = 'scratch operand']
  #allocation5 [shape = 's32[1]{0}', space=sflag, size = 0x4, scoped, tag = 'scoped memory for _lstm_pallas.1']
  #allocation6 [shape = 's32[1]{0:T(128)S(6)}', space=smem, size = 0x200, scoped, tag = 'prefetched SMEM operand 0']
  %s0 = inlined_call_operand.<no memory space> [shape: s32[1], index: 0, kind: input, shape index: {}]
  %s1 = inlined_call_operand.vmem [shape: s32[8,1], index: 1, kind: input, shape index: {}]
  %s2 = inlined_call_operand.vmem [shape: bf16[96,32], index: 2, kind: input, shape index: {}]
  %s3 = inlined_call_operand.vmem [shape: bf16[32,128], index: 3, kind: input, shape index: {}]
  %s4 = inlined_call_operand.vmem [shape: bf16[32,128], index: 4, kind: input, shape index: {}]
  %s5 = inlined_call_operand.vmem [shape: f32[1,128], index: 5, kind: input, shape index: {}]
  %s6 = inlined_call_operand.vmem [shape: f32[96,32], index: 6, kind: output, shape index: {}]
  %s7 = sld [smem:[#allocation0]]
  $region65: #{_lstm_pallas.1} parent=0
    _
  %s9 = ssub.s32 1, %s7
  %s10 = scalar_select 0, %s9, %s7
  %11 = sst [smem:[#allocation6]] %s0
  loop: start=0, step=1, limit=5
  $region2: #{_lstm_pallas.1} parent=0 // loop_pre_header
    _
  $region3: #{_lstm_pallas.1} parent=0 // loop_header
    %s13 = sphi 0, %s17
    %p14 = scmp.ge.s32.totalorder %s13, 5
    %s21 = sphi 0, %s21
    %s23 = sphi 0, %s21
    %s24 = sphi 0, %s23
    %s38 = sphi 0, %s24
    %s44 = sphi 0, %s46
    %s47 = sphi 0, %s44
    %s48 = sphi 0, %s47
    %s64 = sphi 0, %s48
    %s68 = sphi 0, %s68
    %s70 = sphi 0, %s68
    %s71 = sphi 0, %s70
    %s85 = sphi 0, %s71
    %s89 = sphi 0, %s89
    %s91 = sphi 0, %s89
    %s92 = sphi 0, %s91
    %s106 = sphi 0, %s92
    %s110 = sphi 0, %s110
    %s112 = sphi 0, %s110
    %s113 = sphi 0, %s112
    %s127 = sphi 0, %s113
    %s133 = sphi 0, %s135
    %s136 = sphi 0, %s133
    %s137 = sphi 0, %s136
    %s153 = sphi 0, %s137
  $region4: #{_lstm_pallas.1} parent=0 // loop_header_branch
    %16 = sbr.rel (%p14) target = $region8
  $region5: #{_lstm_pallas.1} parent=0 // loop_body
    %s18 = ssub.s32 %s13, 1
    %s19 = ssub.s32 %s13, 2
    %s20 = sadd.s32 %s13, 1
    %s22 = sadd.s32 %s21, 1
    %p25 = scmp.eq.s32.totalorder %s13, 2
    %p26 = scmp.ne.s32.totalorder %s21, %s23
    %p27 = scmp.eq.s32.totalorder %s13, 0
    %p28 = por %p26, %p27
    %p29 = scmp.ne.s32.totalorder %s21, %s23
    %p30 = scmp.eq.s32.totalorder %s18, 2
    %p31 = por %p29, %p30
    %p32 = scmp.ne.s32.totalorder %s23, %s24
    %p33 = scmp.eq.s32.totalorder %s18, 0
    %p34 = por %p32, %p33
    %p35 = scmp.ne.s32.totalorder %s23, %s24
    %p36 = scmp.eq.s32.totalorder %s19, 2
    %p37 = por %p35, %p36
    %p39 = scmp.ne.s32.totalorder %s24, %s38
    %p40 = scmp.eq.s32.totalorder %s19, 0
    %p41 = por %p39, %p40
    %s42 = ssub.s32 %s13, %s20
    %p43 = scmp.eq.s32.totalorder %s42, 0
    %s45 = sadd.s32 %s44, 1
    %s46 = scalar_select %p43, %s44, %s45
    %p49 = pneg %p43
    %p50 = scmp.eq.s32.totalorder %s13, 2
    %p51 = por %p49, %p50
    %p52 = scmp.ne.s32.totalorder %s44, %s47
    %p53 = scmp.eq.s32.totalorder %s13, 0
    %p54 = por %p52, %p53
    %p55 = scmp.ne.s32.totalorder %s44, %s47
    %p56 = scmp.eq.s32.totalorder %s18, 2
    %p57 = por %p55, %p56
    %p58 = scmp.ne.s32.totalorder %s47, %s48
    %p59 = scmp.eq.s32.totalorder %s18, 0
    %p60 = por %p58, %p59
    %p61 = scmp.ne.s32.totalorder %s47, %s48
    %p62 = scmp.eq.s32.totalorder %s19, 2
    %p63 = por %p61, %p62
    %p65 = scmp.ne.s32.totalorder %s48, %s64
    %p66 = scmp.eq.s32.totalorder %s19, 0
    %p67 = por %p65, %p66
    %s69 = sadd.s32 %s68, 1
    %p72 = scmp.eq.s32.totalorder %s13, 2
    %p73 = scmp.ne.s32.totalorder %s68, %s70
    %p74 = scmp.eq.s32.totalorder %s13, 0
    %p75 = por %p73, %p74
    %p76 = scmp.ne.s32.totalorder %s68, %s70
    %p77 = scmp.eq.s32.totalorder %s18, 2
    %p78 = por %p76, %p77
    %p79 = scmp.ne.s32.totalorder %s70, %s71
    %p80 = scmp.eq.s32.totalorder %s18, 0
    %p81 = por %p79, %p80
    %p82 = scmp.ne.s32.totalorder %s70, %s71
    %p83 = scmp.eq.s32.totalorder %s19, 2
    %p84 = por %p82, %p83
    %p86 = scmp.ne.s32.totalorder %s71, %s85
    %p87 = scmp.eq.s32.totalorder %s19, 0
    %p88 = por %p86, %p87
    %s90 = sadd.s32 %s89, 1
    %p93 = scmp.eq.s32.totalorder %s13, 2
    %p94 = scmp.ne.s32.totalorder %s89, %s91
    %p95 = scmp.eq.s32.totalorder %s13, 0
    %p96 = por %p94, %p95
    %p97 = scmp.ne.s32.totalorder %s89, %s91
    %p98 = scmp.eq.s32.totalorder %s18, 2
    %p99 = por %p97, %p98
    %p100 = scmp.ne.s32.totalorder %s91, %s92
    %p101 = scmp.eq.s32.totalorder %s18, 0
    %p102 = por %p100, %p101
    %p103 = scmp.ne.s32.totalorder %s91, %s92
    %p104 = scmp.eq.s32.totalorder %s19, 2
    %p105 = por %p103, %p104
    %p107 = scmp.ne.s32.totalorder %s92, %s106
    %p108 = scmp.eq.s32.totalorder %s19, 0
    %p109 = por %p107, %p108
    %s111 = sadd.s32 %s110, 1
    %p114 = scmp.eq.s32.totalorder %s13, 2
    %p115 = scmp.ne.s32.totalorder %s110, %s112
    %p116 = scmp.eq.s32.totalorder %s13, 0
    %p117 = por %p115, %p116
    %p118 = scmp.ne.s32.totalorder %s110, %s112
    %p119 = scmp.eq.s32.totalorder %s18, 2
    %p120 = por %p118, %p119
    %p121 = scmp.ne.s32.totalorder %s112, %s113
    %p122 = scmp.eq.s32.totalorder %s18, 0
    %p123 = por %p121, %p122
    %p124 = scmp.ne.s32.totalorder %s112, %s113
    %p125 = scmp.eq.s32.totalorder %s19, 2
    %p126 = por %p124, %p125
    %p128 = scmp.ne.s32.totalorder %s113, %s127
    %p129 = scmp.eq.s32.totalorder %s19, 0
    %p130 = por %p128, %p129
    %s131 = ssub.s32 %s13, %s20
    %p132 = scmp.eq.s32.totalorder %s131, 0
    %s134 = sadd.s32 %s133, 1
    %s135 = scalar_select %p132, %s133, %s134
    %p138 = pneg %p132
    %p139 = scmp.eq.s32.totalorder %s13, 2
    %p140 = por %p138, %p139
    %p141 = scmp.ne.s32.totalorder %s133, %s136
    %p142 = scmp.eq.s32.totalorder %s13, 0
    %p143 = por %p141, %p142
    %p144 = scmp.ne.s32.totalorder %s133, %s136
    %p145 = scmp.eq.s32.totalorder %s18, 2
    %p146 = por %p144, %p145
    %p147 = scmp.ne.s32.totalorder %s136, %s137
    %p148 = scmp.eq.s32.totalorder %s18, 0
    %p149 = por %p147, %p148
    %p150 = scmp.ne.s32.totalorder %s136, %s137
    %p151 = scmp.eq.s32.totalorder %s19, 2
    %p152 = por %p150, %p151
    %p154 = scmp.ne.s32.totalorder %s137, %s153
    %p155 = scmp.eq.s32.totalorder %s19, 0
    %p156 = por %p154, %p155
    %p157 = scmp.le.s32.totalorder 1, %s13
    %p158 = scmp.lt.s32.totalorder %s13, 4
    %p159 = pnand %p157, %p158
    %p160 = pneg %p159
    // Predicated region
    $region9: #{_lstm_pallas.1} parent=5 // pred_check
      _
    $region10: #{_lstm_pallas.1} parent=5 // pred_check_branch
      %162 = sbr.rel (%p159) target = $region12
    $region11: #{_lstm_pallas.1} parent=5 // pred_region
      %s163 = ssub.s32 %s13, 1
      // Predicated region
      $region13: #{_lstm_pallas.1} parent=11 // pred_check
        %p164 = pneg %p34
      $region14: #{_lstm_pallas.1} parent=11 // pred_check_branch
        %166 = sbr.rel (%p164) target = $region16
      $region15: #{_lstm_pallas.1} parent=11 // pred_region
        _
      $region16: #{_lstm_pallas.1} parent=11 // pred_fallthru
        _
      // Predicated region
      $region17: #{_lstm_pallas.1} parent=11 // pred_check
        %p167 = pneg %p81
      $region18: #{_lstm_pallas.1} parent=11 // pred_check_branch
        %169 = sbr.rel (%p167) target = $region20
      $region19: #{_lstm_pallas.1} parent=11 // pred_region
        _
      $region20: #{_lstm_pallas.1} parent=11 // pred_fallthru
        _
      // Predicated region
      $region21: #{_lstm_pallas.1} parent=11 // pred_check
        %p170 = pneg %p102
      $region22: #{_lstm_pallas.1} parent=11 // pred_check_branch
        %172 = sbr.rel (%p170) target = $region24
      $region23: #{_lstm_pallas.1} parent=11 // pred_region
        _
      $region24: #{_lstm_pallas.1} parent=11 // pred_fallthru
        _
      // Predicated region
      $region25: #{_lstm_pallas.1} parent=11 // pred_check
        %p173 = pneg %p123
      $region26: #{_lstm_pallas.1} parent=11 // pred_check_branch
        %175 = sbr.rel (%p173) target = $region28
      $region27: #{_lstm_pallas.1} parent=11 // pred_region
        _
      $region28: #{_lstm_pallas.1} parent=11 // pred_fallthru
        _
    $region12: #{_lstm_pallas.1} parent=5 // pred_fallthru
      _
    %p176 = scmp.lt.s32.totalorder %s13, 3
    // Predicated region
    $region29: #{_lstm_pallas.1} parent=5 // pred_check
      %p177 = pneg %p176
    $region30: #{_lstm_pallas.1} parent=5 // pred_check_branch
      %179 = sbr.rel (%p177) target = $region32
    $region31: #{_lstm_pallas.1} parent=5 // pred_region
      // Predicated region
      $region33: #{_lstm_pallas.1} parent=31 // pred_check
        %p180 = pneg %p54
      $region34: #{_lstm_pallas.1} parent=31 // pred_check_branch
        %182 = sbr.rel (%p180) target = $region36
      $region35: #{_lstm_pallas.1} parent=31 // pred_region
        %s183 = smul.u32 4, %s13
        %p184 = scmp.lt.s32.totalorder %s183, 11
        %s185 = scalar_select %p184, %s183, 11
        %s186 = smul.addr %s185, 4
        %s187 = scalar_lea.vmem %s2, %s186
        %s188 = smul.u32 4, %s13
      $region36: #{_lstm_pallas.1} parent=31 // pred_fallthru
        _
    $region32: #{_lstm_pallas.1} parent=5 // pred_fallthru
      _
    %p189 = scmp.le.s32.totalorder 1, %s13
    %p190 = scmp.lt.s32.totalorder %s13, 4
    %p191 = pnand %p189, %p190
    %p192 = pneg %p191
    // Predicated region
    $region37: #{_lstm_pallas.1} parent=5 // pred_check
      _
    $region38: #{_lstm_pallas.1} parent=5 // pred_check_branch
      %194 = sbr.rel (%p191) target = $region40
    $region39: #{_lstm_pallas.1} parent=5 // pred_region
      %s195 = ssub.s32 %s13, 1
      %p196 = pneg %p34
      %p197 = pneg %p31
      %s198 = smul.u32 4, %s18
      %p199 = scmp.lt.s32.totalorder %s198, 11
      %s200 = scalar_select %p199, %s198, 11
      %s201 = smul.addr %s200, 4
      %s202 = scalar_lea.vmem %s2, %s201
      %p203 = pneg %p60
      %p204 = pneg %p57
      %p205 = pneg %p81
      %p206 = pneg %p78
      %p207 = pneg %p102
      %p208 = pneg %p99
      %p209 = pneg %p123
      %p210 = pneg %p120
      %p211 = pneg %p149
      %p212 = pneg %p146
      %s213 = smul.u32 4, %s18
      %p214 = scmp.lt.s32.totalorder %s213, 11
      %s215 = scalar_select %p214, %s213, 11
      %s216 = smul.addr %s215, 8
      %s217 = scalar_lea.vmem %s6, %s216
      %s218 = smul.u32 4, %s18
      %p219 = scmp.lt.s32.totalorder %s218, 11
      %s220 = scalar_select %p219, %s218, 11
      %s221 = smul.addr %s220, 4
      %s222 = scalar_lea.vmem %s2, %s221
      %s223 = smul.u32 4, %s18
      %s224 = smul.u32 4, %s18
      %p225 = scmp.lt.s32.totalorder %s224, 11
      %s226 = scalar_select %p225, %s224, 11
      %s227 = smul.addr %s226, 8
      %s228 = scalar_lea.vmem %s6, %s227
      %s229 = smul.u32 4, %s18
      %s231 = smul.u32 %s18, 4
      %p232 = scmp.eq.s32.totalorder %s18, 0
      // Predicated region
      $region41: #{_lstm_pallas.1} parent=39 // pred_check
        %p233 = pneg %p232
      $region42: #{_lstm_pallas.1} parent=39 // pred_check_branch
        %235 = sbr.rel (%p233) target = $region44
      $region43: #{_lstm_pallas.1} parent=39 // pred_region
        %vm236 = vcmask 261120
        %237 = vst.msk [vmem:[#allocation2] sm:$0xff] %vm236, 0.0
        %238 = vst.msk [vmem:[#allocation3] sm:$0xff] %vm236, 0.0
      $region44: #{_lstm_pallas.1} parent=39 // pred_fallthru
        _
      %s239 = sld [smem:[#allocation6]]
      %p240 = scmp.lt.s32.totalorder %s231, %s239
      %p241 = scmp.ge.s32.totalorder %s231, %s239
      // Predicated region
      $region45: #{_lstm_pallas.1} parent=39 // pred_check
        %p242 = pneg %p241
      $region46: #{_lstm_pallas.1} parent=39 // pred_check_branch
        %244 = sbr.rel (%p242) target = $region48
      $region47: #{_lstm_pallas.1} parent=39 // pred_region
        %vm245 = vcmask 261120
        %246 = vst.msk [vmem:[%s228] sm:$0xff] %vm245, 0.0
        %247 = vst.msk [vmem:[%s228 + $0x8] sm:$0xff] %vm245, 0.0
        %248 = vst.msk [vmem:[%s228 + $0x10] sm:$0xff] %vm245, 0.0
        %249 = vst.msk [vmem:[%s228 + $0x18] sm:$0xff] %vm245, 0.0
      $region48: #{_lstm_pallas.1} parent=39 // pred_fallthru
        _
      // Predicated region
      $region49: #{_lstm_pallas.1} parent=39 // pred_check
        %p250 = pneg %p240
      $region50: #{_lstm_pallas.1} parent=39 // pred_check_branch
        %252 = sbr.rel (%p250) target = $region52
      $region51: #{_lstm_pallas.1} parent=39 // pred_region
        %v253 = vld [vmem:[%s222] sm:$0xf]
        %v254 = vld [vmem:[%s222 + $0x4] sm:$0xf]
        %v255 = vld [vmem:[%s222 + $0x8] sm:$0xf]
        %v256 = vld [vmem:[%s222 + $0xc] sm:$0xf]
        %v257 = vld [vmem:[%s3] sm:$0xf]
        %v258 = vld [vmem:[%s3 + $0x4] sm:$0xf]
        %v259 = vld [vmem:[%s3 + $0x8] sm:$0xf]
        %v260 = vld [vmem:[%s3 + $0xc] sm:$0xf]
        %v261 = vld [vmem:[%s5] sm:$0x1]
        %v263 = vlaneseq
        %v264 = vshrl.u32 %v263, 7
        %v265 = vsub.s32 0, %v264
        %v266 = vrot.slane %v261, %v265
        %v272 = vunpack.c.l.b16 %v253
        %v273 = vunpack.c.l.b16 %v254
        %v274 = vunpack.c.l.b16 %v255
        %v275 = vunpack.c.l.b16 %v256
        %v276 = vpack.c.b16 %v273, %v272
        %v277 = vpack.c.b16 %v275, %v274
        %v282 = vunpack.c.l.b16 %v257
        %v283 = vunpack.c.l.b16 %v258
        %v284 = vunpack.c.l.b16 %v259
        %v285 = vunpack.c.l.b16 %v260
        %v286 = vpack.c.b16 %v283, %v282
        %v287 = vpack.c.b16 %v285, %v284
        %vm290 = vcmask 261120
        %v292 = vsel %vm290, %v276, 0
        %v295 = vsel %vm290, %v277, 0
        %297 = vmatprep.subr.bf16.mxu0 0
        %298 = vmatpush1.bf16.msra.mxu0 0
        %299 = vmatprep.subr.bf16.mxu0 0
        %300 = vmatpush1.bf16.msra.mxu0 0
        %301 = vmatprep.subr.bf16.mxu0 0
        %302 = vmatpush1.bf16.msra.mxu0 0
        %303 = vmatprep.subr.bf16.mxu0 0
        %304 = vmatpush1.bf16.msra.mxu0 0
        %305 = vmatprep.subr.bf16.mxu0 0
        %306 = vmatpush1.bf16.msra.mxu0 0
        %307 = vmatprep.subr.bf16.mxu0 0
        %308 = vmatpush1.bf16.msra.mxu0 0
        %309 = vmatprep.subr.bf16.mxu0 0
        %310 = vmatpush1.bf16.msra.mxu0 %v287
        %311 = vmatprep.subr.bf16.mxu0 0
        %312 = vmatpush1.bf16.msra.mxu0 %v286
        %313 = vmatprep.subr.bf16.mxu0 0
        %314 = vmatpush2.bf16.msra.mxu0 0
        %315 = vmatprep.subr.bf16.mxu0 0
        %316 = vmatpush2.bf16.msra.mxu0 0
        %317 = vmatprep.subr.bf16.mxu0 0
        %318 = vmatpush2.bf16.msra.mxu0 0
        %319 = vmatprep.subr.bf16.mxu0 0
        %320 = vmatpush2.bf16.msra.mxu0 0
        %321 = vmatprep.subr.bf16.mxu0 0
        %322 = vmatpush2.bf16.msra.mxu0 0
        %323 = vmatprep.subr.bf16.mxu0 0
        %324 = vmatpush2.bf16.msra.mxu0 0
        %325 = vmatprep.subr.bf16.mxu0 0
        %326 = vmatpush2.bf16.msra.mxu0 0
        %327 = vmatprep.subr.bf16.mxu0 0
        %328 = vmatpush2.bf16.msra.mxu0 0
        %329 = vmatprep.mubr.bf16.mxu0 0
        %330 = vmatmul.mubr.bf16.gmra.mxu0 %v292
        %v331 = vpop.f32.mrf.mxu0
        %v332 = vadd.f32 %v266, %v331
        %v333 = vpop.f32.mrf.mxu0
        %v334 = vpop.f32.mrf.mxu0
        %v335 = vadd.f32 %v266, %v334
        %v336 = vpop.f32.mrf.mxu0
        %337 = vmatprep.mubr.bf16.mxu0 0
        %338 = vmatmul.mubr.bf16.gmra.mxu0 %v295
        %v339 = vpop.f32.mrf.mxu0
        %v340 = vadd.f32 %v266, %v339
        %v341 = vpop.f32.mrf.mxu0
        %v342 = vpop.f32.mrf.mxu0
        %v343 = vadd.f32 %v266, %v342
        %v344 = vpop.f32.mrf.mxu0
        %345 = vdwg.mxu0
        %346 = vst [vmem:[#allocation4] sm:$0xff] %v332
        %347 = vst [vmem:[#allocation4 + $0x8] sm:$0xff] %v335
        %348 = vst [vmem:[#allocation4 + $0x10] sm:$0xff] %v340
        %349 = vst [vmem:[#allocation4 + $0x18] sm:$0xff] %v343
        %v350 = vld [vmem:[%s4] sm:$0xf]
        %v351 = vld [vmem:[%s4 + $0x4] sm:$0xf]
        %v352 = vld [vmem:[%s4 + $0x8] sm:$0xf]
        %v353 = vld [vmem:[%s4 + $0xc] sm:$0xf]
        %v354 = vld [vmem:[%s1] sm:$0xff]
        %v355 = vstv %s231
        %v356 = vsub.s32 %v354, %v355
        %v357 = vld [vmem:[#allocation2] sm:$0xff]
        %v358 = vld [vmem:[#allocation3] sm:$0xff]
        %v359 = vld [vmem:[#allocation4] sm:$0xff]
        %v360 = vpack.c.bf16 %v357, %v357
        %v365 = vunpack.c.l.b16 %v350
        %v366 = vunpack.c.l.b16 %v351
        %v367 = vunpack.c.l.b16 %v352
        %v368 = vunpack.c.l.b16 %v353
        %v369 = vpack.c.b16 %v366, %v365
        %v370 = vpack.c.b16 %v368, %v367
        %v374 = vsel %vm290, %v360, 0
        %376 = vmatprep.subr.bf16.mxu0 0
        %377 = vmatpush1.bf16.msra.mxu0 0
        %378 = vmatprep.subr.bf16.mxu0 0
        %379 = vmatpush1.bf16.msra.mxu0 0
        %380 = vmatprep.subr.bf16.mxu0 0
        %381 = vmatpush1.bf16.msra.mxu0 0
        %382 = vmatprep.subr.bf16.mxu0 0
        %383 = vmatpush1.bf16.msra.mxu0 0
        %384 = vmatprep.subr.bf16.mxu0 0
        %385 = vmatpush1.bf16.msra.mxu0 0
        %386 = vmatprep.subr.bf16.mxu0 0
        %387 = vmatpush1.bf16.msra.mxu0 0
        %388 = vmatprep.subr.bf16.mxu0 0
        %389 = vmatpush1.bf16.msra.mxu0 %v370
        %390 = vmatprep.subr.bf16.mxu0 0
        %391 = vmatpush1.bf16.msra.mxu0 %v369
        %392 = vmatprep.subr.bf16.mxu0 0
        %393 = vmatpush2.bf16.msra.mxu0 0
        %394 = vmatprep.subr.bf16.mxu0 0
        %395 = vmatpush2.bf16.msra.mxu0 0
        %396 = vmatprep.subr.bf16.mxu0 0
        %397 = vmatpush2.bf16.msra.mxu0 0
        %398 = vmatprep.subr.bf16.mxu0 0
        %399 = vmatpush2.bf16.msra.mxu0 0
        %400 = vmatprep.subr.bf16.mxu0 0
        %401 = vmatpush2.bf16.msra.mxu0 0
        %402 = vmatprep.subr.bf16.mxu0 0
        %403 = vmatpush2.bf16.msra.mxu0 0
        %404 = vmatprep.subr.bf16.mxu0 0
        %405 = vmatpush2.bf16.msra.mxu0 0
        %406 = vmatprep.subr.bf16.mxu0 0
        %407 = vmatpush2.bf16.msra.mxu0 0
        %408 = vmatprep.mubr.bf16.mxu0 0
        %409 = vmatmul.mubr.bf16.gmra.mxu0 %v374
        %v410 = vpop.f32.mrf.mxu0
        %v411 = vadd.f32 0.0, %v410
        %v412 = vpop.f32.mrf.mxu0
        %v413 = vpop.f32.mrf.mxu0
        %v414 = vpop.f32.mrf.mxu0
        %415 = vdwg.mxu0
        %v416 = vadd.f32 %v359, %v411
        %v417 = vxor.u32 %v416, 2147483648
        %v418 = vmul.f32 %v417, 1.442695
        %v419 = vpow.pop %v418
        %v420 = vadd.f32 %v419, 1.0
        %v421 = vrcp.pop %v420
        %v422 = vmul.f32 1.0, %v421
        %v423 = vtanh.pop %v416
        %425 = vrot.lane.b32.xlu0 %v358, 32
        %v426 = vpop.permute.xlu0 %425
        %v428 = vmul.f32 %v422, %v426
        %430 = vrot.lane.b32.xlu0 %v423, 64
        %v431 = vpop.permute.xlu0 %430
        %v433 = vmul.f32 %v422, %v431
        %435 = vrot.lane.b32.xlu0 %v433, 32
        %v436 = vpop.permute.xlu0 %435
        %v438 = vadd.f32 %v428, %v436
        %v439 = vtanh.pop %v438
        %441 = vrot.lane.b32.xlu0 %v439, 64
        %v442 = vpop.permute.xlu0 %441
        %v444 = vmul.f32 %v422, %v442
        %vm445 = vcmp.gt.s32.totalorder %v356, 0
        %v446 = vsel %vm445, 1, 0
        %447 = vset.pattern.permute.xlu0 0
        %448 = vperm.xlu0 %447, %v446
        %v449 = vpop.permute.xlu0 %448
        %vm450 = vcmp.eq.s32.totalorder %v449, 1
        %v451 = vsel %vm450, %v444, 0.0
        %453 = vrot.lane.b32.xlu0 %v451, 32
        %v454 = vpop.permute.xlu0 %453
        %456 = vst.msk [vmem:[%s228] sm:$0xff] %vm290, %v454
        %s457 = scalar_lea.vmem [#allocation4], 8
        %v458 = vld [vmem:[%s457] sm:$0xff]
        %v459 = vpack.c.bf16 %v444, %v444
        %461 = vrot.lane.b32.xlu0 %v459, 32
        %v462 = vpop.permute.xlu0 %461
        %v464 = vsel %vm290, %v462, 0
        %466 = vmatprep.subr.bf16.mxu0 0
        %467 = vmatpush1.bf16.msra.mxu0 0
        %468 = vmatprep.subr.bf16.mxu0 0
        %469 = vmatpush1.bf16.msra.mxu0 0
        %470 = vmatprep.subr.bf16.mxu0 0
        %471 = vmatpush1.bf16.msra.mxu0 0
        %472 = vmatprep.subr.bf16.mxu0 0
        %473 = vmatpush1.bf16.msra.mxu0 0
        %474 = vmatprep.subr.bf16.mxu0 0
        %475 = vmatpush1.bf16.msra.mxu0 0
        %476 = vmatprep.subr.bf16.mxu0 0
        %477 = vmatpush1.bf16.msra.mxu0 0
        %478 = vmatprep.subr.bf16.mxu0 0
        %479 = vmatpush1.bf16.msra.mxu0 %v370
        %480 = vmatprep.subr.bf16.mxu0 0
        %481 = vmatpush1.bf16.msra.mxu0 %v369
        %482 = vmatprep.subr.bf16.mxu0 0
        %483 = vmatpush2.bf16.msra.mxu0 0
        %484 = vmatprep.subr.bf16.mxu0 0
        %485 = vmatpush2.bf16.msra.mxu0 0
        %486 = vmatprep.subr.bf16.mxu0 0
        %487 = vmatpush2.bf16.msra.mxu0 0
        %488 = vmatprep.subr.bf16.mxu0 0
        %489 = vmatpush2.bf16.msra.mxu0 0
        %490 = vmatprep.subr.bf16.mxu0 0
        %491 = vmatpush2.bf16.msra.mxu0 0
        %492 = vmatprep.subr.bf16.mxu0 0
        %493 = vmatpush2.bf16.msra.mxu0 0
        %494 = vmatprep.subr.bf16.mxu0 0
        %495 = vmatpush2.bf16.msra.mxu0 0
        %496 = vmatprep.subr.bf16.mxu0 0
        %497 = vmatpush2.bf16.msra.mxu0 0
        %498 = vmatprep.mubr.bf16.mxu0 0
        %499 = vmatmul.mubr.bf16.gmra.mxu0 %v464
        %v500 = vpop.f32.mrf.mxu0
        %v501 = vadd.f32 0.0, %v500
        %v502 = vpop.f32.mrf.mxu0
        %v503 = vpop.f32.mrf.mxu0
        %v504 = vpop.f32.mrf.mxu0
        %505 = vdwg.mxu0
        %v506 = vadd.f32 %v458, %v501
        %v507 = vxor.u32 %v506, 2147483648
        %v508 = vmul.f32 %v507, 1.442695
        %v509 = vpow.pop %v508
        %v510 = vadd.f32 %v509, 1.0
        %v511 = vrcp.pop %v510
        %v512 = vmul.f32 1.0, %v511
        %v513 = vtanh.pop %v506
        %v514 = vmul.f32 %v512, %v438
        %516 = vrot.lane.b32.xlu0 %v513, 64
        %v517 = vpop.permute.xlu0 %516
        %v519 = vmul.f32 %v512, %v517
        %521 = vrot.lane.b32.xlu0 %v519, 32
        %v522 = vpop.permute.xlu0 %521
        %v524 = vadd.f32 %v514, %v522
        %v525 = vtanh.pop %v524
        %527 = vrot.lane.b32.xlu0 %v525, 64
        %v528 = vpop.permute.xlu0 %527
        %v530 = vmul.f32 %v512, %v528
        %vm531 = vcmp.gt.s32.totalorder %v356, 1
        %v532 = vsel %vm531, 1, 0
        %533 = vset.pattern.permute.xlu0 0
        %534 = vperm.xlu0 %533, %v532
        %v535 = vpop.permute.xlu0 %534
        %vm536 = vcmp.eq.s32.totalorder %v535, 1
        %v537 = vsel %vm536, %v530, 0.0
        %539 = vrot.lane.b32.xlu0 %v537, 32
        %v540 = vpop.permute.xlu0 %539
        %s542 = scalar_lea.vmem %s228, 8
        %543 = vst.msk [vmem:[%s542] sm:$0xff] %vm290, %v540
        %s544 = scalar_lea.vmem [#allocation4], 16
        %v545 = vld [vmem:[%s544] sm:$0xff]
        %v546 = vpack.c.bf16 %v530, %v530
        %548 = vrot.lane.b32.xlu0 %v546, 32
        %v549 = vpop.permute.xlu0 %548
        %v551 = vsel %vm290, %v549, 0
        %553 = vmatprep.subr.bf16.mxu0 0
        %554 = vmatpush1.bf16.msra.mxu0 0
        %555 = vmatprep.subr.bf16.mxu0 0
        %556 = vmatpush1.bf16.msra.mxu0 0
        %557 = vmatprep.subr.bf16.mxu0 0
        %558 = vmatpush1.bf16.msra.mxu0 0
        %559 = vmatprep.subr.bf16.mxu0 0
        %560 = vmatpush1.bf16.msra.mxu0 0
        %561 = vmatprep.subr.bf16.mxu0 0
        %562 = vmatpush1.bf16.msra.mxu0 0
        %563 = vmatprep.subr.bf16.mxu0 0
        %564 = vmatpush1.bf16.msra.mxu0 0
        %565 = vmatprep.subr.bf16.mxu0 0
        %566 = vmatpush1.bf16.msra.mxu0 %v370
        %567 = vmatprep.subr.bf16.mxu0 0
        %568 = vmatpush1.bf16.msra.mxu0 %v369
        %569 = vmatprep.subr.bf16.mxu0 0
        %570 = vmatpush2.bf16.msra.mxu0 0
        %571 = vmatprep.subr.bf16.mxu0 0
        %572 = vmatpush2.bf16.msra.mxu0 0
        %573 = vmatprep.subr.bf16.mxu0 0
        %574 = vmatpush2.bf16.msra.mxu0 0
        %575 = vmatprep.subr.bf16.mxu0 0
        %576 = vmatpush2.bf16.msra.mxu0 0
        %577 = vmatprep.subr.bf16.mxu0 0
        %578 = vmatpush2.bf16.msra.mxu0 0
        %579 = vmatprep.subr.bf16.mxu0 0
        %580 = vmatpush2.bf16.msra.mxu0 0
        %581 = vmatprep.subr.bf16.mxu0 0
        %582 = vmatpush2.bf16.msra.mxu0 0
        %583 = vmatprep.subr.bf16.mxu0 0
        %584 = vmatpush2.bf16.msra.mxu0 0
        %585 = vmatprep.mubr.bf16.mxu0 0
        %586 = vmatmul.mubr.bf16.gmra.mxu0 %v551
        %v587 = vpop.f32.mrf.mxu0
        %v588 = vadd.f32 0.0, %v587
        %v589 = vpop.f32.mrf.mxu0
        %v590 = vpop.f32.mrf.mxu0
        %v591 = vpop.f32.mrf.mxu0
        %592 = vdwg.mxu0
        %v593 = vadd.f32 %v545, %v588
        %v594 = vxor.u32 %v593, 2147483648
        %v595 = vmul.f32 %v594, 1.442695
        %v596 = vpow.pop %v595
        %v597 = vadd.f32 %v596, 1.0
        %v598 = vrcp.pop %v597
        %v599 = vmul.f32 1.0, %v598
        %v600 = vtanh.pop %v593
        %v601 = vmul.f32 %v599, %v524
        %603 = vrot.lane.b32.xlu0 %v600, 64
        %v604 = vpop.permute.xlu0 %603
        %v606 = vmul.f32 %v599, %v604
        %608 = vrot.lane.b32.xlu0 %v606, 32
        %v609 = vpop.permute.xlu0 %608
        %v611 = vadd.f32 %v601, %v609
        %v612 = vtanh.pop %v611
        %614 = vrot.lane.b32.xlu0 %v612, 64
        %v615 = vpop.permute.xlu0 %614
        %v617 = vmul.f32 %v599, %v615
        %vm618 = vcmp.gt.s32.totalorder %v356, 2
        %v619 = vsel %vm618, 1, 0
        %620 = vset.pattern.permute.xlu0 0
        %621 = vperm.xlu0 %620, %v619
        %v622 = vpop.permute.xlu0 %621
        %vm623 = vcmp.eq.s32.totalorder %v622, 1
        %v624 = vsel %vm623, %v617, 0.0
        %626 = vrot.lane.b32.xlu0 %v624, 32
        %v627 = vpop.permute.xlu0 %626
        %s629 = scalar_lea.vmem %s228, 16
        %630 = vst.msk [vmem:[%s629] sm:$0xff] %vm290, %v627
        %s631 = scalar_lea.vmem [#allocation4], 24
        %v632 = vld [vmem:[%s631] sm:$0xff]
        %v633 = vpack.c.bf16 %v617, %v617
        %635 = vrot.lane.b32.xlu0 %v633, 32
        %v636 = vpop.permute.xlu0 %635
        %v638 = vsel %vm290, %v636, 0
        %640 = vmatprep.subr.bf16.mxu0 0
        %641 = vmatpush1.bf16.msra.mxu0 0
        %642 = vmatprep.subr.bf16.mxu0 0
        %643 = vmatpush1.bf16.msra.mxu0 0
        %644 = vmatprep.subr.bf16.mxu0 0
        %645 = vmatpush1.bf16.msra.mxu0 0
        %646 = vmatprep.subr.bf16.mxu0 0
        %647 = vmatpush1.bf16.msra.mxu0 0
        %648 = vmatprep.subr.bf16.mxu0 0
        %649 = vmatpush1.bf16.msra.mxu0 0
        %650 = vmatprep.subr.bf16.mxu0 0
        %651 = vmatpush1.bf16.msra.mxu0 0
        %652 = vmatprep.subr.bf16.mxu0 0
        %653 = vmatpush1.bf16.msra.mxu0 %v370
        %654 = vmatprep.subr.bf16.mxu0 0
        %655 = vmatpush1.bf16.msra.mxu0 %v369
        %656 = vmatprep.subr.bf16.mxu0 0
        %657 = vmatpush2.bf16.msra.mxu0 0
        %658 = vmatprep.subr.bf16.mxu0 0
        %659 = vmatpush2.bf16.msra.mxu0 0
        %660 = vmatprep.subr.bf16.mxu0 0
        %661 = vmatpush2.bf16.msra.mxu0 0
        %662 = vmatprep.subr.bf16.mxu0 0
        %663 = vmatpush2.bf16.msra.mxu0 0
        %664 = vmatprep.subr.bf16.mxu0 0
        %665 = vmatpush2.bf16.msra.mxu0 0
        %666 = vmatprep.subr.bf16.mxu0 0
        %667 = vmatpush2.bf16.msra.mxu0 0
        %668 = vmatprep.subr.bf16.mxu0 0
        %669 = vmatpush2.bf16.msra.mxu0 0
        %670 = vmatprep.subr.bf16.mxu0 0
        %671 = vmatpush2.bf16.msra.mxu0 0
        %672 = vmatprep.mubr.bf16.mxu0 0
        %673 = vmatmul.mubr.bf16.gmra.mxu0 %v638
        %v674 = vpop.f32.mrf.mxu0
        %v675 = vadd.f32 0.0, %v674
        %v676 = vpop.f32.mrf.mxu0
        %v677 = vpop.f32.mrf.mxu0
        %v678 = vpop.f32.mrf.mxu0
        %679 = vdwg.mxu0
        %v680 = vadd.f32 %v632, %v675
        %v681 = vxor.u32 %v680, 2147483648
        %v682 = vmul.f32 %v681, 1.442695
        %v683 = vpow.pop %v682
        %v684 = vadd.f32 %v683, 1.0
        %v685 = vrcp.pop %v684
        %v686 = vmul.f32 1.0, %v685
        %v687 = vtanh.pop %v680
        %v688 = vmul.f32 %v686, %v611
        %690 = vrot.lane.b32.xlu0 %v687, 64
        %v691 = vpop.permute.xlu0 %690
        %v693 = vmul.f32 %v686, %v691
        %695 = vrot.lane.b32.xlu0 %v693, 32
        %v696 = vpop.permute.xlu0 %695
        %v698 = vadd.f32 %v688, %v696
        %v699 = vtanh.pop %v698
        %701 = vrot.lane.b32.xlu0 %v699, 64
        %v702 = vpop.permute.xlu0 %701
        %v704 = vmul.f32 %v686, %v702
        %vm705 = vcmp.gt.s32.totalorder %v356, 3
        %v706 = vsel %vm705, 1, 0
        %707 = vset.pattern.permute.xlu0 0
        %708 = vperm.xlu0 %707, %v706
        %v709 = vpop.permute.xlu0 %708
        %vm710 = vcmp.eq.s32.totalorder %v709, 1
        %v711 = vsel %vm710, %v704, 0.0
        %713 = vrot.lane.b32.xlu0 %v711, 32
        %v714 = vpop.permute.xlu0 %713
        %s716 = scalar_lea.vmem %s228, 24
        %717 = vst.msk [vmem:[%s716] sm:$0xff] %vm290, %v714
        %719 = vrot.lane.b32.xlu0 %v704, 32
        %v720 = vpop.permute.xlu0 %719
        %722 = vst.msk [vmem:[#allocation2] sm:$0xff] %vm290, %v720
        %724 = vrot.lane.b32.xlu0 %v698, 96
        %v725 = vpop.permute.xlu0 %724
        %727 = vst.msk [vmem:[#allocation3] sm:$0xff] %vm290, %v725
      $region52: #{_lstm_pallas.1} parent=39 // pred_fallthru
        _
      %s728 = smul.u32 4, %s18
      %p729 = scmp.lt.s32.totalorder %s728, 11
      %s730 = scalar_select %p729, %s728, 11
      %s731 = smul.addr %s730, 8
      %s732 = scalar_lea.vmem %s6, %s731
      // Predicated region
      $region53: #{_lstm_pallas.1} parent=39 // pred_check
        %p733 = pneg %p146
      $region54: #{_lstm_pallas.1} parent=39 // pred_check_branch
        %735 = sbr.rel (%p733) target = $region56
      $region55: #{_lstm_pallas.1} parent=39 // pred_region
        %s736 = smul.u32 4, %s18
      $region56: #{_lstm_pallas.1} parent=39 // pred_fallthru
        _
    $region40: #{_lstm_pallas.1} parent=5 // pred_fallthru
      _
    %p737 = scmp.le.s32.totalorder 2, %s13
    // Predicated region
    $region57: #{_lstm_pallas.1} parent=5 // pred_check
      %p738 = pneg %p737
    $region58: #{_lstm_pallas.1} parent=5 // pred_check_branch
      %740 = sbr.rel (%p738) target = $region60
    $region59: #{_lstm_pallas.1} parent=5 // pred_region
      %s741 = ssub.s32 %s13, 2
      // Predicated region
      $region61: #{_lstm_pallas.1} parent=59 // pred_check
        %p742 = pneg %p152
      $region62: #{_lstm_pallas.1} parent=59 // pred_check_branch
        %744 = sbr.rel (%p742) target = $region64
      $region63: #{_lstm_pallas.1} parent=59 // pred_region
        %s745 = smul.u32 4, %s19
        %p746 = scmp.lt.s32.totalorder %s745, 11
        %s747 = scalar_select %p746, %s745, 11
        %s748 = smul.addr %s747, 8
        %s749 = scalar_lea.vmem %s6, %s748
      $region64: #{_lstm_pallas.1} parent=59 // pred_fallthru
        _
    $region60: #{_lstm_pallas.1} parent=5 // pred_fallthru
      _
  $region6: #{_lstm_pallas.1} parent=0 // loop_footer
    %s17 = sadd.s32 1, %s13
  $region7: #{_lstm_pallas.1} parent=0 // loop_footer_branch
    %12 = sbr.rel target = $region3
  $region8: #{_lstm_pallas.1} parent=0 // loop_exit
    _

// kernel: _lstm_pallas.1
$region0: #{_lstm_pallas.1}
  #allocation0 [shape = 'u32[]', space=smem, size = 0x4, offset = 0x4, fixed_abs, tag = 'smem constant byte address 0x4 - core index']
  #allocation1 [shape = 'u32[144,128]{1,0:T(1,128)}', space=vmem, size = 0x12000, scoped, tag = 'internal scratch']
  #allocation2 [shape = 'f32[8,32]{1,0:T(8,128)}', space=vmem, size = 0x1000, scoped, tag = 'scratch operand']
  #allocation3 [shape = 'f32[8,32]{1,0:T(8,128)}', space=vmem, size = 0x1000, scoped, tag = 'scratch operand']
  #allocation4 [shape = 'f32[32,128]{1,0:T(8,128)}', space=vmem, size = 0x4000, scoped, tag = 'scratch operand']
  #allocation5 [shape = 's32[1]{0}', space=sflag, size = 0x4, scoped, tag = 'scoped memory for _lstm_pallas.1']
  #allocation6 [shape = 's32[1]{0:T(128)S(6)}', space=smem, size = 0x200, scoped, tag = 'prefetched SMEM operand 0']
  %s0 = inlined_call_operand.<no memory space> [shape: s32[1], index: 0, kind: input, shape index: {}]
  %s1 = inlined_call_operand.vmem [shape: s32[8,1], index: 1, kind: input, shape index: {}]
  %s2 = inlined_call_operand.vmem [shape: bf16[96,32], index: 2, kind: input, shape index: {}]
  %s3 = inlined_call_operand.vmem [shape: bf16[32,128], index: 3, kind: input, shape index: {}]
  %s4 = inlined_call_operand.vmem [shape: bf16[32,128], index: 4, kind: input, shape index: {}]
  %s5 = inlined_call_operand.vmem [shape: f32[1,128], index: 5, kind: input, shape index: {}]
  %s6 = inlined_call_operand.vmem [shape: f32[96,32], index: 6, kind: output, shape index: {}]
  %s7 = sld [smem:[#allocation0]]
  $region65: #{_lstm_pallas.1} parent=0
    _
  %s9 = ssub.s32 1, %s7
  %s10 = scalar_select 0, %s9, %s7
  %11 = sst [smem:[#allocation6]] %s0
  loop: start=0, step=1, limit=5
  $region2: #{_lstm_pallas.1} parent=0 // loop_pre_header
    _
  $region3: #{_lstm_pallas.1} parent=0 // loop_header
    %s13 = sphi 0, %s17
    %p14 = scmp.ge.s32.totalorder %s13, 5
    %s21 = sphi 0, %s21
    %s23 = sphi 0, %s21
    %s24 = sphi 0, %s23
    %s38 = sphi 0, %s24
    %s44 = sphi 0, %s46
    %s47 = sphi 0, %s44
    %s48 = sphi 0, %s47
    %s64 = sphi 0, %s48
    %s68 = sphi 0, %s68
    %s70 = sphi 0, %s68
    %s71 = sphi 0, %s70
    %s85 = sphi 0, %s71
    %s89 = sphi 0, %s89
    %s91 = sphi 0, %s89
    %s92 = sphi 0, %s91
    %s106 = sphi 0, %s92
    %s110 = sphi 0, %s110
    %s112 = sphi 0, %s110
    %s113 = sphi 0, %s112
    %s127 = sphi 0, %s113
    %s133 = sphi 0, %s135
    %s136 = sphi 0, %s133
    %s137 = sphi 0, %s136
    %s153 = sphi 0, %s137
  $region4: #{_lstm_pallas.1} parent=0 // loop_header_branch
    %16 = sbr.rel (%p14) target = $region8
  $region5: #{_lstm_pallas.1} parent=0 // loop_body
    %s18 = ssub.s32 %s13, 1
    %s19 = ssub.s32 %s13, 2
    %s20 = sadd.s32 %s13, 1
    %s22 = sadd.s32 %s21, 1
    %p25 = scmp.eq.s32.totalorder %s13, 2
    %p26 = scmp.ne.s32.totalorder %s21, %s23
    %p27 = scmp.eq.s32.totalorder %s13, 0
    %p28 = por %p26, %p27
    %p29 = scmp.ne.s32.totalorder %s21, %s23
    %p30 = scmp.eq.s32.totalorder %s18, 2
    %p31 = por %p29, %p30
    %p32 = scmp.ne.s32.totalorder %s23, %s24
    %p33 = scmp.eq.s32.totalorder %s18, 0
    %p34 = por %p32, %p33
    %p35 = scmp.ne.s32.totalorder %s23, %s24
    %p36 = scmp.eq.s32.totalorder %s19, 2
    %p37 = por %p35, %p36
    %p39 = scmp.ne.s32.totalorder %s24, %s38
    %p40 = scmp.eq.s32.totalorder %s19, 0
    %p41 = por %p39, %p40
    %s42 = ssub.s32 %s13, %s20
    %p43 = scmp.eq.s32.totalorder %s42, 0
    %s45 = sadd.s32 %s44, 1
    %s46 = scalar_select %p43, %s44, %s45
    %p49 = pneg %p43
    %p50 = scmp.eq.s32.totalorder %s13, 2
    %p51 = por %p49, %p50
    %p52 = scmp.ne.s32.totalorder %s44, %s47
    %p53 = scmp.eq.s32.totalorder %s13, 0
    %p54 = por %p52, %p53
    %p55 = scmp.ne.s32.totalorder %s44, %s47
    %p56 = scmp.eq.s32.totalorder %s18, 2
    %p57 = por %p55, %p56
    %p58 = scmp.ne.s32.totalorder %s47, %s48
    %p59 = scmp.eq.s32.totalorder %s18, 0
    %p60 = por %p58, %p59
    %p61 = scmp.ne.s32.totalorder %s47, %s48
    %p62 = scmp.eq.s32.totalorder %s19, 2
    %p63 = por %p61, %p62
    %p65 = scmp.ne.s32.totalorder %s48, %s64
    %p66 = scmp.eq.s32.totalorder %s19, 0
    %p67 = por %p65, %p66
    %s69 = sadd.s32 %s68, 1
    %p72 = scmp.eq.s32.totalorder %s13, 2
    %p73 = scmp.ne.s32.totalorder %s68, %s70
    %p74 = scmp.eq.s32.totalorder %s13, 0
    %p75 = por %p73, %p74
    %p76 = scmp.ne.s32.totalorder %s68, %s70
    %p77 = scmp.eq.s32.totalorder %s18, 2
    %p78 = por %p76, %p77
    %p79 = scmp.ne.s32.totalorder %s70, %s71
    %p80 = scmp.eq.s32.totalorder %s18, 0
    %p81 = por %p79, %p80
    %p82 = scmp.ne.s32.totalorder %s70, %s71
    %p83 = scmp.eq.s32.totalorder %s19, 2
    %p84 = por %p82, %p83
    %p86 = scmp.ne.s32.totalorder %s71, %s85
    %p87 = scmp.eq.s32.totalorder %s19, 0
    %p88 = por %p86, %p87
    %s90 = sadd.s32 %s89, 1
    %p93 = scmp.eq.s32.totalorder %s13, 2
    %p94 = scmp.ne.s32.totalorder %s89, %s91
    %p95 = scmp.eq.s32.totalorder %s13, 0
    %p96 = por %p94, %p95
    %p97 = scmp.ne.s32.totalorder %s89, %s91
    %p98 = scmp.eq.s32.totalorder %s18, 2
    %p99 = por %p97, %p98
    %p100 = scmp.ne.s32.totalorder %s91, %s92
    %p101 = scmp.eq.s32.totalorder %s18, 0
    %p102 = por %p100, %p101
    %p103 = scmp.ne.s32.totalorder %s91, %s92
    %p104 = scmp.eq.s32.totalorder %s19, 2
    %p105 = por %p103, %p104
    %p107 = scmp.ne.s32.totalorder %s92, %s106
    %p108 = scmp.eq.s32.totalorder %s19, 0
    %p109 = por %p107, %p108
    %s111 = sadd.s32 %s110, 1
    %p114 = scmp.eq.s32.totalorder %s13, 2
    %p115 = scmp.ne.s32.totalorder %s110, %s112
    %p116 = scmp.eq.s32.totalorder %s13, 0
    %p117 = por %p115, %p116
    %p118 = scmp.ne.s32.totalorder %s110, %s112
    %p119 = scmp.eq.s32.totalorder %s18, 2
    %p120 = por %p118, %p119
    %p121 = scmp.ne.s32.totalorder %s112, %s113
    %p122 = scmp.eq.s32.totalorder %s18, 0
    %p123 = por %p121, %p122
    %p124 = scmp.ne.s32.totalorder %s112, %s113
    %p125 = scmp.eq.s32.totalorder %s19, 2
    %p126 = por %p124, %p125
    %p128 = scmp.ne.s32.totalorder %s113, %s127
    %p129 = scmp.eq.s32.totalorder %s19, 0
    %p130 = por %p128, %p129
    %s131 = ssub.s32 %s13, %s20
    %p132 = scmp.eq.s32.totalorder %s131, 0
    %s134 = sadd.s32 %s133, 1
    %s135 = scalar_select %p132, %s133, %s134
    %p138 = pneg %p132
    %p139 = scmp.eq.s32.totalorder %s13, 2
    %p140 = por %p138, %p139
    %p141 = scmp.ne.s32.totalorder %s133, %s136
    %p142 = scmp.eq.s32.totalorder %s13, 0
    %p143 = por %p141, %p142
    %p144 = scmp.ne.s32.totalorder %s133, %s136
    %p145 = scmp.eq.s32.totalorder %s18, 2
    %p146 = por %p144, %p145
    %p147 = scmp.ne.s32.totalorder %s136, %s137
    %p148 = scmp.eq.s32.totalorder %s18, 0
    %p149 = por %p147, %p148
    %p150 = scmp.ne.s32.totalorder %s136, %s137
    %p151 = scmp.eq.s32.totalorder %s19, 2
    %p152 = por %p150, %p151
    %p154 = scmp.ne.s32.totalorder %s137, %s153
    %p155 = scmp.eq.s32.totalorder %s19, 0
    %p156 = por %p154, %p155
    %p157 = scmp.le.s32.totalorder 1, %s13
    %p158 = scmp.lt.s32.totalorder %s13, 4
    %p159 = pnand %p157, %p158
    %p160 = pneg %p159
    // Predicated region
    $region9: #{_lstm_pallas.1} parent=5 // pred_check
      _
    $region10: #{_lstm_pallas.1} parent=5 // pred_check_branch
      %162 = sbr.rel (%p159) target = $region12
    $region11: #{_lstm_pallas.1} parent=5 // pred_region
      %s163 = ssub.s32 %s13, 1
      // Predicated region
      $region13: #{_lstm_pallas.1} parent=11 // pred_check
        %p164 = pneg %p34
      $region14: #{_lstm_pallas.1} parent=11 // pred_check_branch
        %166 = sbr.rel (%p164) target = $region16
      $region15: #{_lstm_pallas.1} parent=11 // pred_region
        _
      $region16: #{_lstm_pallas.1} parent=11 // pred_fallthru
        _
      // Predicated region
      $region17: #{_lstm_pallas.1} parent=11 // pred_check
        %p167 = pneg %p81
      $region18: #{_lstm_pallas.1} parent=11 // pred_check_branch
        %169 = sbr.rel (%p167) target = $region20
      $region19: #{_lstm_pallas.1} parent=11 // pred_region
        _
      $region20: #{_lstm_pallas.1} parent=11 // pred_fallthru
        _
      // Predicated region
      $region21: #{_lstm_pallas.1} parent=11 // pred_check
        %p170 = pneg %p102
      $region22: #{_lstm_pallas.1} parent=11 // pred_check_branch
        %172 = sbr.rel (%p170) target = $region24
      $region23: #{_lstm_pallas.1} parent=11 // pred_region
        _
      $region24: #{_lstm_pallas.1} parent=11 // pred_fallthru
        _
      // Predicated region
      $region25: #{_lstm_pallas.1} parent=11 // pred_check
        %p173 = pneg %p123
      $region26: #{_lstm_pallas.1} parent=11 // pred_check_branch
        %175 = sbr.rel (%p173) target = $region28
      $region27: #{_lstm_pallas.1} parent=11 // pred_region
        _
      $region28: #{_lstm_pallas.1} parent=11 // pred_fallthru
        _
    $region12: #{_lstm_pallas.1} parent=5 // pred_fallthru
      _
    %p176 = scmp.lt.s32.totalorder %s13, 3
    // Predicated region
    $region29: #{_lstm_pallas.1} parent=5 // pred_check
      %p177 = pneg %p176
    $region30: #{_lstm_pallas.1} parent=5 // pred_check_branch
      %179 = sbr.rel (%p177) target = $region32
    $region31: #{_lstm_pallas.1} parent=5 // pred_region
      // Predicated region
      $region33: #{_lstm_pallas.1} parent=31 // pred_check
        %p180 = pneg %p54
      $region34: #{_lstm_pallas.1} parent=31 // pred_check_branch
        %182 = sbr.rel (%p180) target = $region36
      $region35: #{_lstm_pallas.1} parent=31 // pred_region
        %s183 = smul.u32 4, %s13
        %p184 = scmp.lt.s32.totalorder %s183, 11
        %s185 = scalar_select %p184, %s183, 11
        %s186 = smul.addr %s185, 4
        %s187 = scalar_lea.vmem %s2, %s186
        %s188 = smul.u32 4, %s13
      $region36: #{_lstm_pallas.1} parent=31 // pred_fallthru
        _
    $region32: #{_lstm_pallas.1} parent=5 // pred_fallthru
      _
    %p189 = scmp.le.s32.totalorder 1, %s13
    %p190 = scmp.lt.s32.totalorder %s13, 4
    %p191 = pnand %p189, %p190
    %p192 = pneg %p191
    // Predicated region
    $region37: #{_lstm_pallas.1} parent=5 // pred_check
      _
    $region38: #{_lstm_pallas.1} parent=5 // pred_check_branch
      %194 = sbr.rel (%p191) target = $region40
    $region39: #{_lstm_pallas.1} parent=5 // pred_region
      %s195 = ssub.s32 %s13, 1
      %p196 = pneg %p34
      %p197 = pneg %p31
      %s198 = smul.u32 4, %s18
      %p199 = scmp.lt.s32.totalorder %s198, 11
      %s200 = scalar_select %p199, %s198, 11
      %s201 = smul.addr %s200, 4
      %s202 = scalar_lea.vmem %s2, %s201
      %p203 = pneg %p60
      %p204 = pneg %p57
      %p205 = pneg %p81
      %p206 = pneg %p78
      %p207 = pneg %p102
      %p208 = pneg %p99
      %p209 = pneg %p123
      %p210 = pneg %p120
      %p211 = pneg %p149
      %p212 = pneg %p146
      %s213 = smul.u32 4, %s18
      %p214 = scmp.lt.s32.totalorder %s213, 11
      %s215 = scalar_select %p214, %s213, 11
      %s216 = smul.addr %s215, 8
      %s217 = scalar_lea.vmem %s6, %s216
      %s218 = smul.u32 4, %s18
      %p219 = scmp.lt.s32.totalorder %s218, 11
      %s220 = scalar_select %p219, %s218, 11
      %s221 = smul.addr %s220, 4
      %s222 = scalar_lea.vmem %s2, %s221
      %s223 = smul.u32 4, %s18
      %s224 = smul.u32 4, %s18
      %p225 = scmp.lt.s32.totalorder %s224, 11
      %s226 = scalar_select %p225, %s224, 11
      %s227 = smul.addr %s226, 8
      %s228 = scalar_lea.vmem %s6, %s227
      %s229 = smul.u32 4, %s18
      %s231 = smul.u32 %s18, 4
      %p232 = scmp.eq.s32.totalorder %s18, 0
      // Predicated region
      $region41: #{_lstm_pallas.1} parent=39 // pred_check
        %p233 = pneg %p232
      $region42: #{_lstm_pallas.1} parent=39 // pred_check_branch
        %235 = sbr.rel (%p233) target = $region44
      $region43: #{_lstm_pallas.1} parent=39 // pred_region
        %vm236 = vcmask 261120
        %237 = vst.msk [vmem:[#allocation2] sm:$0xff] %vm236, 0.0
        %238 = vst.msk [vmem:[#allocation3] sm:$0xff] %vm236, 0.0
      $region44: #{_lstm_pallas.1} parent=39 // pred_fallthru
        _
      %s239 = sld [smem:[#allocation6]]
      %p240 = scmp.lt.s32.totalorder %s231, %s239
      %p241 = scmp.ge.s32.totalorder %s231, %s239
      // Predicated region
      $region45: #{_lstm_pallas.1} parent=39 // pred_check
        %p242 = pneg %p241
      $region46: #{_lstm_pallas.1} parent=39 // pred_check_branch
        %244 = sbr.rel (%p242) target = $region48
      $region47: #{_lstm_pallas.1} parent=39 // pred_region
        %vm245 = vcmask 261120
        %246 = vst.msk [vmem:[%s228] sm:$0xff] %vm245, 0.0
        %247 = vst.msk [vmem:[%s228 + $0x8] sm:$0xff] %vm245, 0.0
        %248 = vst.msk [vmem:[%s228 + $0x10] sm:$0xff] %vm245, 0.0
        %249 = vst.msk [vmem:[%s228 + $0x18] sm:$0xff] %vm245, 0.0
      $region48: #{_lstm_pallas.1} parent=39 // pred_fallthru
        _
      // Predicated region
      $region49: #{_lstm_pallas.1} parent=39 // pred_check
        %p250 = pneg %p240
      $region50: #{_lstm_pallas.1} parent=39 // pred_check_branch
        %252 = sbr.rel (%p250) target = $region52
      $region51: #{_lstm_pallas.1} parent=39 // pred_region
        %v253 = vld [vmem:[%s222] sm:$0xf]
        %v254 = vld [vmem:[%s222 + $0x4] sm:$0xf]
        %v255 = vld [vmem:[%s222 + $0x8] sm:$0xf]
        %v256 = vld [vmem:[%s222 + $0xc] sm:$0xf]
        %v257 = vld [vmem:[%s3] sm:$0xf]
        %v258 = vld [vmem:[%s3 + $0x4] sm:$0xf]
        %v259 = vld [vmem:[%s3 + $0x8] sm:$0xf]
        %v260 = vld [vmem:[%s3 + $0xc] sm:$0xf]
        %v261 = vld [vmem:[%s5] sm:$0x1]
        %v263 = vlaneseq
        %v264 = vshrl.u32 %v263, 7
        %v265 = vsub.s32 0, %v264
        %v266 = vrot.slane %v261, %v265
        %v272 = vunpack.c.l.b16 %v253
        %v273 = vunpack.c.l.b16 %v254
        %v274 = vunpack.c.l.b16 %v255
        %v275 = vunpack.c.l.b16 %v256
        %v276 = vpack.c.b16 %v273, %v272
        %v277 = vpack.c.b16 %v275, %v274
        %v282 = vunpack.c.l.b16 %v257
        %v283 = vunpack.c.l.b16 %v258
        %v284 = vunpack.c.l.b16 %v259
        %v285 = vunpack.c.l.b16 %v260
        %v286 = vpack.c.b16 %v283, %v282
        %v287 = vpack.c.b16 %v285, %v284
        %vm290 = vcmask 261120
        %v292 = vsel %vm290, %v276, 0
        %v295 = vsel %vm290, %v277, 0
        %297 = vmatprep.subr.bf16.mxu0 0
        %298 = vmatpush1.bf16.msra.mxu0 0
        %299 = vmatprep.subr.bf16.mxu0 0
        %300 = vmatpush1.bf16.msra.mxu0 0
        %301 = vmatprep.subr.bf16.mxu0 0
        %302 = vmatpush1.bf16.msra.mxu0 0
        %303 = vmatprep.subr.bf16.mxu0 0
        %304 = vmatpush1.bf16.msra.mxu0 0
        %305 = vmatprep.subr.bf16.mxu0 0
        %306 = vmatpush1.bf16.msra.mxu0 0
        %307 = vmatprep.subr.bf16.mxu0 0
        %308 = vmatpush1.bf16.msra.mxu0 0
        %309 = vmatprep.subr.bf16.mxu0 0
        %310 = vmatpush1.bf16.msra.mxu0 %v287
        %311 = vmatprep.subr.bf16.mxu0 0
        %312 = vmatpush1.bf16.msra.mxu0 %v286
        %313 = vmatprep.subr.bf16.mxu0 0
        %314 = vmatpush2.bf16.msra.mxu0 0
        %315 = vmatprep.subr.bf16.mxu0 0
        %316 = vmatpush2.bf16.msra.mxu0 0
        %317 = vmatprep.subr.bf16.mxu0 0
        %318 = vmatpush2.bf16.msra.mxu0 0
        %319 = vmatprep.subr.bf16.mxu0 0
        %320 = vmatpush2.bf16.msra.mxu0 0
        %321 = vmatprep.subr.bf16.mxu0 0
        %322 = vmatpush2.bf16.msra.mxu0 0
        %323 = vmatprep.subr.bf16.mxu0 0
        %324 = vmatpush2.bf16.msra.mxu0 0
        %325 = vmatprep.subr.bf16.mxu0 0
        %326 = vmatpush2.bf16.msra.mxu0 0
        %327 = vmatprep.subr.bf16.mxu0 0
        %328 = vmatpush2.bf16.msra.mxu0 0
        %329 = vmatprep.mubr.bf16.mxu0 0
        %330 = vmatmul.mubr.bf16.gmra.mxu0 %v292
        %v331 = vpop.f32.mrf.mxu0
        %v332 = vadd.f32 %v266, %v331
        %v333 = vpop.f32.mrf.mxu0
        %v334 = vpop.f32.mrf.mxu0
        %v335 = vadd.f32 %v266, %v334
        %v336 = vpop.f32.mrf.mxu0
        %337 = vmatprep.mubr.bf16.mxu0 0
        %338 = vmatmul.mubr.bf16.gmra.mxu0 %v295
        %v339 = vpop.f32.mrf.mxu0
        %v340 = vadd.f32 %v266, %v339
        %v341 = vpop.f32.mrf.mxu0
        %v342 = vpop.f32.mrf.mxu0
        %v343 = vadd.f32 %v266, %v342
        %v344 = vpop.f32.mrf.mxu0
        %345 = vdwg.mxu0
        %346 = vst [vmem:[#allocation4] sm:$0xff] %v332
        %347 = vst [vmem:[#allocation4 + $0x8] sm:$0xff] %v335
        %348 = vst [vmem:[#allocation4 + $0x10] sm:$0xff] %v340
        %349 = vst [vmem:[#allocation4 + $0x18] sm:$0xff] %v343
        %v350 = vld [vmem:[%s4] sm:$0xf]
        %v351 = vld [vmem:[%s4 + $0x4] sm:$0xf]
        %v352 = vld [vmem:[%s4 + $0x8] sm:$0xf]
        %v353 = vld [vmem:[%s4 + $0xc] sm:$0xf]
        %v354 = vld [vmem:[%s1] sm:$0xff]
        %v355 = vstv %s231
        %v356 = vsub.s32 %v354, %v355
        %v357 = vld [vmem:[#allocation2] sm:$0xff]
        %v358 = vld [vmem:[#allocation3] sm:$0xff]
        %v359 = vld [vmem:[#allocation4] sm:$0xff]
        %v360 = vpack.c.bf16 %v357, %v357
        %v365 = vunpack.c.l.b16 %v350
        %v366 = vunpack.c.l.b16 %v351
        %v367 = vunpack.c.l.b16 %v352
        %v368 = vunpack.c.l.b16 %v353
        %v369 = vpack.c.b16 %v366, %v365
        %v370 = vpack.c.b16 %v368, %v367
        %v374 = vsel %vm290, %v360, 0
        %376 = vmatprep.subr.bf16.mxu0 0
        %377 = vmatpush1.bf16.msra.mxu0 0
        %378 = vmatprep.subr.bf16.mxu0 0
        %379 = vmatpush1.bf16.msra.mxu0 0
        %380 = vmatprep.subr.bf16.mxu0 0
        %381 = vmatpush1.bf16.msra.mxu0 0
        %382 = vmatprep.subr.bf16.mxu0 0
        %383 = vmatpush1.bf16.msra.mxu0 0
        %384 = vmatprep.subr.bf16.mxu0 0
        %385 = vmatpush1.bf16.msra.mxu0 0
        %386 = vmatprep.subr.bf16.mxu0 0
        %387 = vmatpush1.bf16.msra.mxu0 0
        %388 = vmatprep.subr.bf16.mxu0 0
        %389 = vmatpush1.bf16.msra.mxu0 %v370
        %390 = vmatprep.subr.bf16.mxu0 0
        %391 = vmatpush1.bf16.msra.mxu0 %v369
        %392 = vmatprep.subr.bf16.mxu0 0
        %393 = vmatpush2.bf16.msra.mxu0 0
        %394 = vmatprep.subr.bf16.mxu0 0
        %395 = vmatpush2.bf16.msra.mxu0 0
        %396 = vmatprep.subr.bf16.mxu0 0
        %397 = vmatpush2.bf16.msra.mxu0 0
        %398 = vmatprep.subr.bf16.mxu0 0
        %399 = vmatpush2.bf16.msra.mxu0 0
        %400 = vmatprep.subr.bf16.mxu0 0
        %401 = vmatpush2.bf16.msra.mxu0 0
        %402 = vmatprep.subr.bf16.mxu0 0
        %403 = vmatpush2.bf16.msra.mxu0 0
        %404 = vmatprep.subr.bf16.mxu0 0
        %405 = vmatpush2.bf16.msra.mxu0 0
        %406 = vmatprep.subr.bf16.mxu0 0
        %407 = vmatpush2.bf16.msra.mxu0 0
        %408 = vmatprep.mubr.bf16.mxu0 0
        %409 = vmatmul.mubr.bf16.gmra.mxu0 %v374
        %v410 = vpop.f32.mrf.mxu0
        %v411 = vadd.f32 0.0, %v410
        %v412 = vpop.f32.mrf.mxu0
        %v413 = vpop.f32.mrf.mxu0
        %v414 = vpop.f32.mrf.mxu0
        %415 = vdwg.mxu0
        %v416 = vadd.f32 %v359, %v411
        %v417 = vxor.u32 %v416, 2147483648
        %v418 = vmul.f32 %v417, 1.442695
        %v419 = vpow.pop %v418
        %v420 = vadd.f32 %v419, 1.0
        %v421 = vrcp.pop %v420
        %v422 = vmul.f32 1.0, %v421
        %v423 = vtanh.pop %v416
        %425 = vrot.lane.b32.xlu0 %v358, 32
        %v426 = vpop.permute.xlu0 %425
        %v428 = vmul.f32 %v422, %v426
        %430 = vrot.lane.b32.xlu0 %v423, 64
        %v431 = vpop.permute.xlu0 %430
        %v433 = vmul.f32 %v422, %v431
        %435 = vrot.lane.b32.xlu0 %v433, 32
        %v436 = vpop.permute.xlu0 %435
        %v438 = vadd.f32 %v428, %v436
        %v439 = vtanh.pop %v438
        %441 = vrot.lane.b32.xlu0 %v439, 64
        %v442 = vpop.permute.xlu0 %441
        %v444 = vmul.f32 %v422, %v442
        %vm445 = vcmp.gt.s32.totalorder %v356, 0
        %v446 = vsel %vm445, 1, 0
        %447 = vset.pattern.permute.xlu0 0
        %448 = vperm.xlu0 %447, %v446
        %v449 = vpop.permute.xlu0 %448
        %vm450 = vcmp.eq.s32.totalorder %v449, 1
        %v451 = vsel %vm450, %v444, 0.0
        %453 = vrot.lane.b32.xlu0 %v451, 32
        %v454 = vpop.permute.xlu0 %453
        %456 = vst.msk [vmem:[%s228] sm:$0xff] %vm290, %v454
        %s457 = scalar_lea.vmem [#allocation4], 8
        %v458 = vld [vmem:[%s457] sm:$0xff]
        %v459 = vpack.c.bf16 %v444, %v444
        %461 = vrot.lane.b32.xlu0 %v459, 32
        %v462 = vpop.permute.xlu0 %461
        %v464 = vsel %vm290, %v462, 0
        %466 = vmatprep.subr.bf16.mxu0 0
        %467 = vmatpush1.bf16.msra.mxu0 0
        %468 = vmatprep.subr.bf16.mxu0 0
        %469 = vmatpush1.bf16.msra.mxu0 0
        %470 = vmatprep.subr.bf16.mxu0 0
        %471 = vmatpush1.bf16.msra.mxu0 0
        %472 = vmatprep.subr.bf16.mxu0 0
        %473 = vmatpush1.bf16.msra.mxu0 0
        %474 = vmatprep.subr.bf16.mxu0 0
        %475 = vmatpush1.bf16.msra.mxu0 0
        %476 = vmatprep.subr.bf16.mxu0 0
        %477 = vmatpush1.bf16.msra.mxu0 0
        %478 = vmatprep.subr.bf16.mxu0 0
        %479 = vmatpush1.bf16.msra.mxu0 %v370
        %480 = vmatprep.subr.bf16.mxu0 0
        %481 = vmatpush1.bf16.msra.mxu0 %v369
        %482 = vmatprep.subr.bf16.mxu0 0
        %483 = vmatpush2.bf16.msra.mxu0 0
        %484 = vmatprep.subr.bf16.mxu0 0
        %485 = vmatpush2.bf16.msra.mxu0 0
        %486 = vmatprep.subr.bf16.mxu0 0
        %487 = vmatpush2.bf16.msra.mxu0 0
        %488 = vmatprep.subr.bf16.mxu0 0
        %489 = vmatpush2.bf16.msra.mxu0 0
        %490 = vmatprep.subr.bf16.mxu0 0
        %491 = vmatpush2.bf16.msra.mxu0 0
        %492 = vmatprep.subr.bf16.mxu0 0
        %493 = vmatpush2.bf16.msra.mxu0 0
        %494 = vmatprep.subr.bf16.mxu0 0
        %495 = vmatpush2.bf16.msra.mxu0 0
        %496 = vmatprep.subr.bf16.mxu0 0
        %497 = vmatpush2.bf16.msra.mxu0 0
        %498 = vmatprep.mubr.bf16.mxu0 0
        %499 = vmatmul.mubr.bf16.gmra.mxu0 %v464
        %v500 = vpop.f32.mrf.mxu0
        %v501 = vadd.f32 0.0, %v500
        %v502 = vpop.f32.mrf.mxu0
        %v503 = vpop.f32.mrf.mxu0
        %v504 = vpop.f32.mrf.mxu0
        %505 = vdwg.mxu0
        %v506 = vadd.f32 %v458, %v501
        %v507 = vxor.u32 %v506, 2147483648
        %v508 = vmul.f32 %v507, 1.442695
        %v509 = vpow.pop %v508
        %v510 = vadd.f32 %v509, 1.0
        %v511 = vrcp.pop %v510
        %v512 = vmul.f32 1.0, %v511
        %v513 = vtanh.pop %v506
        %v514 = vmul.f32 %v512, %v438
        %516 = vrot.lane.b32.xlu0 %v513, 64
        %v517 = vpop.permute.xlu0 %516
        %v519 = vmul.f32 %v512, %v517
        %521 = vrot.lane.b32.xlu0 %v519, 32
        %v522 = vpop.permute.xlu0 %521
        %v524 = vadd.f32 %v514, %v522
        %v525 = vtanh.pop %v524
        %527 = vrot.lane.b32.xlu0 %v525, 64
        %v528 = vpop.permute.xlu0 %527
        %v530 = vmul.f32 %v512, %v528
        %vm531 = vcmp.gt.s32.totalorder %v356, 1
        %v532 = vsel %vm531, 1, 0
        %533 = vset.pattern.permute.xlu0 0
        %534 = vperm.xlu0 %533, %v532
        %v535 = vpop.permute.xlu0 %534
        %vm536 = vcmp.eq.s32.totalorder %v535, 1
        %v537 = vsel %vm536, %v530, 0.0
        %539 = vrot.lane.b32.xlu0 %v537, 32
        %v540 = vpop.permute.xlu0 %539
        %s542 = scalar_lea.vmem %s228, 8
        %543 = vst.msk [vmem:[%s542] sm:$0xff] %vm290, %v540
        %s544 = scalar_lea.vmem [#allocation4], 16
        %v545 = vld [vmem:[%s544] sm:$0xff]
        %v546 = vpack.c.bf16 %v530, %v530
        %548 = vrot.lane.b32.xlu0 %v546, 32
        %v549 = vpop.permute.xlu0 %548
        %v551 = vsel %vm290, %v549, 0
        %553 = vmatprep.subr.bf16.mxu0 0
        %554 = vmatpush1.bf16.msra.mxu0 0
        %555 = vmatprep.subr.bf16.mxu0 0
        %556 = vmatpush1.bf16.msra.mxu0 0
        %557 = vmatprep.subr.bf16.mxu0 0
        %558 = vmatpush1.bf16.msra.mxu0 0
        %559 = vmatprep.subr.bf16.mxu0 0
        %560 = vmatpush1.bf16.msra.mxu0 0
        %561 = vmatprep.subr.bf16.mxu0 0
        %562 = vmatpush1.bf16.msra.mxu0 0
        %563 = vmatprep.subr.bf16.mxu0 0
        %564 = vmatpush1.bf16.msra.mxu0 0
        %565 = vmatprep.subr.bf16.mxu0 0
        %566 = vmatpush1.bf16.msra.mxu0 %v370
        %567 = vmatprep.subr.bf16.mxu0 0
        %568 = vmatpush1.bf16.msra.mxu0 %v369
        %569 = vmatprep.subr.bf16.mxu0 0
        %570 = vmatpush2.bf16.msra.mxu0 0
        %571 = vmatprep.subr.bf16.mxu0 0
        %572 = vmatpush2.bf16.msra.mxu0 0
        %573 = vmatprep.subr.bf16.mxu0 0
        %574 = vmatpush2.bf16.msra.mxu0 0
        %575 = vmatprep.subr.bf16.mxu0 0
        %576 = vmatpush2.bf16.msra.mxu0 0
        %577 = vmatprep.subr.bf16.mxu0 0
        %578 = vmatpush2.bf16.msra.mxu0 0
        %579 = vmatprep.subr.bf16.mxu0 0
        %580 = vmatpush2.bf16.msra.mxu0 0
        %581 = vmatprep.subr.bf16.mxu0 0
        %582 = vmatpush2.bf16.msra.mxu0 0
        %583 = vmatprep.subr.bf16.mxu0 0
        %584 = vmatpush2.bf16.msra.mxu0 0
        %585 = vmatprep.mubr.bf16.mxu0 0
        %586 = vmatmul.mubr.bf16.gmra.mxu0 %v551
        %v587 = vpop.f32.mrf.mxu0
        %v588 = vadd.f32 0.0, %v587
        %v589 = vpop.f32.mrf.mxu0
        %v590 = vpop.f32.mrf.mxu0
        %v591 = vpop.f32.mrf.mxu0
        %592 = vdwg.mxu0
        %v593 = vadd.f32 %v545, %v588
        %v594 = vxor.u32 %v593, 2147483648
        %v595 = vmul.f32 %v594, 1.442695
        %v596 = vpow.pop %v595
        %v597 = vadd.f32 %v596, 1.0
        %v598 = vrcp.pop %v597
        %v599 = vmul.f32 1.0, %v598
        %v600 = vtanh.pop %v593
        %v601 = vmul.f32 %v599, %v524
        %603 = vrot.lane.b32.xlu0 %v600, 64
        %v604 = vpop.permute.xlu0 %603
        %v606 = vmul.f32 %v599, %v604
        %608 = vrot.lane.b32.xlu0 %v606, 32
        %v609 = vpop.permute.xlu0 %608
        %v611 = vadd.f32 %v601, %v609
        %v612 = vtanh.pop %v611
        %614 = vrot.lane.b32.xlu0 %v612, 64
        %v615 = vpop.permute.xlu0 %614
        %v617 = vmul.f32 %v599, %v615
        %vm618 = vcmp.gt.s32.totalorder %v356, 2
        %v619 = vsel %vm618, 1, 0
        %620 = vset.pattern.permute.xlu0 0
        %621 = vperm.xlu0 %620, %v619
        %v622 = vpop.permute.xlu0 %621
        %vm623 = vcmp.eq.s32.totalorder %v622, 1
        %v624 = vsel %vm623, %v617, 0.0
        %626 = vrot.lane.b32.xlu0 %v624, 32
        %v627 = vpop.permute.xlu0 %626
        %s629 = scalar_lea.vmem %s228, 16
        %630 = vst.msk [vmem:[%s629] sm:$0xff] %vm290, %v627
        %s631 = scalar_lea.vmem [#allocation4], 24
        %v632 = vld [vmem:[%s631] sm:$0xff]
        %v633 = vpack.c.bf16 %v617, %v617
        %635 = vrot.lane.b32.xlu0 %v633, 32
        %v636 = vpop.permute.xlu0 %635
        %v638 = vsel %vm290, %v636, 0
        %640 = vmatprep.subr.bf16.mxu0 0
        %641 = vmatpush1.bf16.msra.mxu0 0
        %642 = vmatprep.subr.bf16.mxu0 0
        %643 = vmatpush1.bf16.msra.mxu0 0
        %644 = vmatprep.subr.bf16.mxu0 0
        %645 = vmatpush1.bf16.msra.mxu0 0
        %646 = vmatprep.subr.bf16.mxu0 0
        %647 = vmatpush1.bf16.msra.mxu0 0
        %648 = vmatprep.subr.bf16.mxu0 0
        %649 = vmatpush1.bf16.msra.mxu0 0
        %650 = vmatprep.subr.bf16.mxu0 0
        %651 = vmatpush1.bf16.msra.mxu0 0
        %652 = vmatprep.subr.bf16.mxu0 0
        %653 = vmatpush1.bf16.msra.mxu0 %v370
        %654 = vmatprep.subr.bf16.mxu0 0
        %655 = vmatpush1.bf16.msra.mxu0 %v369
        %656 = vmatprep.subr.bf16.mxu0 0
        %657 = vmatpush2.bf16.msra.mxu0 0
        %658 = vmatprep.subr.bf16.mxu0 0
        %659 = vmatpush2.bf16.msra.mxu0 0
        %660 = vmatprep.subr.bf16.mxu0 0
        %661 = vmatpush2.bf16.msra.mxu0 0
        %662 = vmatprep.subr.bf16.mxu0 0
        %663 = vmatpush2.bf16.msra.mxu0 0
        %664 = vmatprep.subr.bf16.mxu0 0
        %665 = vmatpush2.bf16.msra.mxu0 0
        %666 = vmatprep.subr.bf16.mxu0 0
        %667 = vmatpush2.bf16.msra.mxu0 0
        %668 = vmatprep.subr.bf16.mxu0 0
        %669 = vmatpush2.bf16.msra.mxu0 0
        %670 = vmatprep.subr.bf16.mxu0 0
        %671 = vmatpush2.bf16.msra.mxu0 0
        %672 = vmatprep.mubr.bf16.mxu0 0
        %673 = vmatmul.mubr.bf16.gmra.mxu0 %v638
        %v674 = vpop.f32.mrf.mxu0
        %v675 = vadd.f32 0.0, %v674
        %v676 = vpop.f32.mrf.mxu0
        %v677 = vpop.f32.mrf.mxu0
        %v678 = vpop.f32.mrf.mxu0
        %679 = vdwg.mxu0
        %v680 = vadd.f32 %v632, %v675
        %v681 = vxor.u32 %v680, 2147483648
        %v682 = vmul.f32 %v681, 1.442695
        %v683 = vpow.pop %v682
        %v684 = vadd.f32 %v683, 1.0
        %v685 = vrcp.pop %v684
        %v686 = vmul.f32 1.0, %v685
        %v687 = vtanh.pop %v680
        %v688 = vmul.f32 %v686, %v611
        %690 = vrot.lane.b32.xlu0 %v687, 64
        %v691 = vpop.permute.xlu0 %690
        %v693 = vmul.f32 %v686, %v691
        %695 = vrot.lane.b32.xlu0 %v693, 32
        %v696 = vpop.permute.xlu0 %695
        %v698 = vadd.f32 %v688, %v696
        %v699 = vtanh.pop %v698
        %701 = vrot.lane.b32.xlu0 %v699, 64
        %v702 = vpop.permute.xlu0 %701
        %v704 = vmul.f32 %v686, %v702
        %vm705 = vcmp.gt.s32.totalorder %v356, 3
        %v706 = vsel %vm705, 1, 0
        %707 = vset.pattern.permute.xlu0 0
        %708 = vperm.xlu0 %707, %v706
        %v709 = vpop.permute.xlu0 %708
        %vm710 = vcmp.eq.s32.totalorder %v709, 1
        %v711 = vsel %vm710, %v704, 0.0
        %713 = vrot.lane.b32.xlu0 %v711, 32
        %v714 = vpop.permute.xlu0 %713
        %s716 = scalar_lea.vmem %s228, 24
        %717 = vst.msk [vmem:[%s716] sm:$0xff] %vm290, %v714
        %719 = vrot.lane.b32.xlu0 %v704, 32
        %v720 = vpop.permute.xlu0 %719
        %722 = vst.msk [vmem:[#allocation2] sm:$0xff] %vm290, %v720
        %724 = vrot.lane.b32.xlu0 %v698, 96
        %v725 = vpop.permute.xlu0 %724
        %727 = vst.msk [vmem:[#allocation3] sm:$0xff] %vm290, %v725
      $region52: #{_lstm_pallas.1} parent=39 // pred_fallthru
        _
      %s728 = smul.u32 4, %s18
      %p729 = scmp.lt.s32.totalorder %s728, 11
      %s730 = scalar_select %p729, %s728, 11
      %s731 = smul.addr %s730, 8
      %s732 = scalar_lea.vmem %s6, %s731
      // Predicated region
      $region53: #{_lstm_pallas.1} parent=39 // pred_check
        %p733 = pneg %p146
      $region54: #{_lstm_pallas.1} parent=39 // pred_check_branch
        %735 = sbr.rel (%p733) target = $region56
      $region55: #{_lstm_pallas.1} parent=39 // pred_region
        %s736 = smul.u32 4, %s18
      $region56: #{_lstm_pallas.1} parent=39 // pred_fallthru
        _
    $region40: #{_lstm_pallas.1} parent=5 // pred_fallthru
      _
    %p737 = scmp.le.s32.totalorder 2, %s13
    // Predicated region
    $region57: #{_lstm_pallas.1} parent=5 // pred_check
      %p738 = pneg %p737
    $region58: #{_lstm_pallas.1} parent=5 // pred_check_branch
      %740 = sbr.rel (%p738) target = $region60
    $region59: #{_lstm_pallas.1} parent=5 // pred_region
      %s741 = ssub.s32 %s13, 2
      // Predicated region
      $region61: #{_lstm_pallas.1} parent=59 // pred_check
        %p742 = pneg %p152
      $region62: #{_lstm_pallas.1} parent=59 // pred_check_branch
        %744 = sbr.rel (%p742) target = $region64
      $region63: #{_lstm_pallas.1} parent=59 // pred_region
        %s745 = smul.u32 4, %s19
        %p746 = scmp.lt.s32.totalorder %s745, 11
        %s747 = scalar_select %p746, %s745, 11
        %s748 = smul.addr %s747, 8
        %s749 = scalar_lea.vmem %s6, %s748
      $region64: #{_lstm_pallas.1} parent=59 // pred_fallthru
        _
    $region60: #{_lstm_pallas.1} parent=5 // pred_fallthru
      _
  $region6: #{_lstm_pallas.1} parent=0 // loop_footer
    %s17 = sadd.s32 1, %s13
  $region7: #{_lstm_pallas.1} parent=0 // loop_footer_branch
    %12 = sbr.rel target = $region3
  $region8: #{_lstm_pallas.1} parent=0 // loop_exit
    _

</llo_original>
